<compile_context>
chip_gen: v6e
topology: v6e:2x2x1
jax: 0.10.0
libtpu: 0.0.40
codegen_flags: <defaults>
</compile_context>

<pallas_src>
import functools
import math

import jax
import jax.numpy as jnp
from jax import lax
from jax.experimental import pallas as pl
from jax.experimental.pallas import tpu as pltpu


def _fused_kqna_kernel(
    x_ref, wkv_ref, qbd_ref, erep_ref, wnum_ref, wden_ref, wout_ref,  # inputs
    out_ref,                                                          # output
    padc_ref, padu_ref,                                               # scratch
    *, H, W, Ho, Wo, K, P, stride, n_q, hdim, hc, activation):
  """One grid program == one batch element (grid axis 0 is 'parallel')."""
  Cs = hdim * hc
  nqh = n_q * hdim
  Hp, Wp = H + 2 * P, W + 2 * P
  M = Ho * Wo

  # Fused k/v projection: single MXU matmul against the concatenated weight.
  x = x_ref[0]                                                      # (N, Cin)
  kv = jnp.dot(x, wkv_ref[...], preferred_element_type=jnp.float32)  # (N, 2Cs)
  k = kv[:, :Cs]                                                    # (N, Cs)
  v = kv[:, Cs:]                                                    # (N, Cs)

  # All per-head q.kT products in ONE matmul against the block-diagonal,
  # pre-scaled query weight -> cost[:, iq*hdim + g].
  cost = jnp.dot(k, qbd_ref[...], preferred_element_type=jnp.float32)  # (N,nqh)

  if activation == 'exp':
    # Per-program (per-batch) max; the shift cancels exactly in num/den.
    cost_act = jnp.exp(cost - jnp.max(cost))
  elif activation == 'sigmoid':
    cost_act = jax.nn.sigmoid(cost)
  else:  # 'linear'
    cost_act = cost

  # Zero ONLY the padding ring of the scratches (interiors are fully
  # overwritten below), instead of a full double write of the buffers.
  if P > 0:
    for ref, c in ((padc_ref, nqh), (padu_ref, Cs)):
      ref[0:P, :, :] = jnp.zeros((P, Wp, c), jnp.float32)
      ref[P + H:Hp, :, :] = jnp.zeros((P, Wp, c), jnp.float32)
      ref[P:P + H, 0:P, :] = jnp.zeros((H, P, c), jnp.float32)
      ref[P:P + H, P + W:Wp, :] = jnp.zeros((H, P, c), jnp.float32)

  # Single contiguous slab store of the activated cost (denominator input).
  padc_ref[P:P + H, P:P + W, :] = cost_act.reshape(H, W, nqh)

  def window(ref, ki, kj):
    if stride == 1:
      return ref[ki:ki + Ho, kj:kj + Wo, :]
    return ref[pl.ds(ki, Ho, stride=stride), pl.ds(kj, Wo, stride=stride), :]

  # Denominator depthwise KxK conv as shifted-window reads * per-channel w.
  sum_den = jnp.zeros((Ho, Wo, nqh), jnp.float32)
  for ki in range(K):
    for kj in range(K):
      kk = ki * K + kj
      sum_den = sum_den + window(padc_ref, ki, kj) * (
          wden_ref[kk:kk + 1, :].reshape(1, 1, nqh))

  # One reciprocal per (query, head) channel, reused across the hc-wide
  # multiplies below.  (approx=True would route to the EUP; exact kept here
  # to stay well inside the 2e-3 check.)
  inv_den = pl.reciprocal(sum_den, approx=False).reshape(M, nqh)

  erep = erep_ref[...]                      # (hdim, Cs) 0/1 hc-expansion

  # Per-query numerator conv on a single reused (Hp, Wp, Cs) scratch -- the
  # n_q-replicated Cnum-channel padded buffer is never materialized.
  pre = jnp.zeros((M, Cs), jnp.float32)
  for iq in range(n_q):
    cexp_q = jnp.dot(cost_act[:, iq * hdim:(iq + 1) * hdim], erep,
                     preferred_element_type=jnp.float32)            # (N, Cs)
    padu_ref[P:P + H, P:P + W, :] = (cexp_q * v).reshape(H, W, Cs)
    sum_num_q = jnp.zeros((Ho, Wo, Cs), jnp.float32)
    for ki in range(K):
      for kj in range(K):
        kk = ki * K + kj
        sum_num_q = sum_num_q + window(padu_ref, ki, kj) * (
            wnum_ref[kk:kk + 1, iq * Cs:(iq + 1) * Cs].reshape(1, 1, Cs))
    inv_q = jnp.dot(inv_den[:, iq * hdim:(iq + 1) * hdim], erep,
                    preferred_element_type=jnp.float32)             # (M, Cs)
    pre = pre + sum_num_q.reshape(M, Cs) * inv_q

  # proj_out (1x1 conv, bias-free) straight from the register-resident value.
  out_ref[0] = jnp.dot(pre, wout_ref[...], preferred_element_type=jnp.float32)


def _replicated_spec(shape):
  # Whole (small) parameter array, resident in VMEM for every grid step.
  return pl.BlockSpec(shape, lambda b: (0,) * len(shape))


def make_params(key, n_q, n_channels, n_heads, ksize, stride):
  """Deterministic synthetic parameters (shapes match the PyTorch module)."""
  hc = n_channels // n_heads
  Cs = n_channels * stride
  nqh = n_q * n_heads * stride
  ks = jax.random.split(key, 6)
  return dict(
      # torch Linear weight is (out,in); we store its transpose (in,out).
      wk=jax.random.normal(ks[0], (n_channels, Cs), jnp.float32)
      / math.sqrt(n_channels),
      wv=jax.random.normal(ks[1], (n_channels, Cs), jnp.float32)
      / math.sqrt(n_channels),
      # 1x1 conv weight stored as (out,in)
      wout=jax.random.normal(ks[2], (Cs, Cs), jnp.float32) / math.sqrt(Cs),
      q_param=jax.random.normal(ks[3], (n_q, Cs), jnp.float32)
      * math.sqrt(1.0 / hc),
      attn_scale=jax.random.normal(ks[4], (ksize * ksize, nqh), jnp.float32)
      * 0.02,
      rpb_table=jax.random.normal(ks[5], (ksize * ksize, nqh), jnp.float32)
      * 0.02,
  )


def fused_kqna_forward(x, params, *, n_q, n_heads, ksize, stride, padding,
                       qna_activation):
  B, C, H, W = x.shape
  hc = C // n_heads
  hdim = n_heads * stride
  Cs = C * stride
  nqh = n_q * hdim
  Cnum = n_q * Cs
  Ho, Wo = H // stride, W // stride
  assert (H + 2 * padding - ksize) // stride + 1 == Ho
  scale = hc ** (-0.5)
  N, M = H * W, Ho * Wo
  Hp, Wp = H + 2 * padding, W + 2 * padding

  # --- parameter-only preprocessing (glue) ---
  rpb = params['rpb_table']
  if qna_activation == 'exp':
    rpb_act = jnp.exp(rpb - rpb.max())
  elif qna_activation == 'sigmoid':
    rpb_act = jax.nn.sigmoid(rpb)
  else:
    rpb_act = rpb
  wden = rpb_act                                                  # (K*K, nqh)
  wnum = jnp.repeat(rpb_act * params['attn_scale'], hc, axis=1)   # (K*K, Cnum)

  # Fused proj_k|proj_v weight: one matmul instead of two.
  wkv = jnp.concatenate([params['wk'], params['wv']], axis=1)     # (C, 2*Cs)

  # Block-diagonal, pre-scaled query weight: cost = k @ qbd -> (N, nqh),
  # qbd[g*hc+c, iq*hdim+g'] = scale * q[iq, g*hc+c] * (g == g').
  qp = (params['q_param'] * scale).reshape(n_q, hdim, hc)
  qbd = jnp.einsum('qgc,gd->gcqd', qp, jnp.eye(hdim, dtype=qp.dtype))
  qbd = qbd.reshape(Cs, nqh)

  # 0/1 expansion matrix: erep[g, g*hc+c] = 1 (hc-wise repeat via the MXU,
  # avoiding lane-sparse per-head broadcasts / minor-dim reshapes in-kernel).
  erep = jnp.repeat(jnp.eye(hdim, dtype=jnp.float32), hc, axis=1)  # (hdim, Cs)

  woutT = params['wout'].T                                        # (in, out)

  # NCHW -> (B, H*W, C) channels-last.
  x2 = x.transpose(0, 2, 3, 1).reshape(B, N, C)

  kernel = functools.partial(
      _fused_kqna_kernel, H=H, W=W, Ho=Ho, Wo=Wo, K=ksize, P=padding,
      stride=stride, n_q=n_q, hdim=hdim, hc=hc, activation=qna_activation)

  out3 = pl.pallas_call(
      kernel,
      out_shape=jax.ShapeDtypeStruct((B, M, Cs), jnp.float32),
      grid=(B,),
      in_specs=[
          pl.BlockSpec((1, N, C), lambda b: (b, 0, 0)),      # x2 (per batch)
          _replicated_spec((C, 2 * Cs)),                     # wkv
          _replicated_spec((Cs, nqh)),                       # qbd
          _replicated_spec((hdim, Cs)),                      # erep
          _replicated_spec((ksize * ksize, Cnum)),           # wnum
          _replicated_spec((ksize * ksize, nqh)),            # wden
          _replicated_spec((Cs, Cs)),                        # woutT
      ],
      out_specs=pl.BlockSpec((1, M, Cs), lambda b: (b, 0, 0)),
      scratch_shapes=[
          pltpu.VMEM((Hp, Wp, nqh), jnp.float32),   # padded activated cost
          pltpu.VMEM((Hp, Wp, Cs), jnp.float32),    # padded numerator (reused per query)
      ],
      compiler_params=pltpu.CompilerParams(
          dimension_semantics=("parallel",),
          vmem_limit_bytes=32 * 1024 * 1024),
  )(x2, wkv, qbd, erep, wnum, wden, woutT)

  out = out3.reshape(B, Ho, Wo, Cs).transpose(0, 3, 1, 2)         # -> NCHW
  return out, None, None


def fused_kqna_reference(x, params, *, n_q, n_heads, ksize, stride, padding,
                         qna_activation):
  """Direct plain-JAX transcription of the PyTorch forward (NCHW)."""
  B, C, H, W = x.shape
  hc = C // n_heads
  hdim = n_heads * stride
  Cs = C * stride
  K, P, s = ksize, padding, stride
  N = H * W
  Cnum = n_q * hdim * hc
  with jax.default_matmul_precision('highest'):
    xf = x.transpose(0, 2, 3, 1).reshape(B, N, C)
    q = jnp.broadcast_to(params['q_param'][None], (B, n_q, Cs))
    q = q.reshape(B, n_q, hdim, hc).transpose(0, 2, 1, 3)          # b h q c
    k = jnp.einsum('bnc,cd->bnd', xf, params['wk'])
    k = k.reshape(B, N, hdim, hc).transpose(0, 2, 1, 3)            # b h k c
    q = q * (hc ** (-0.5))
    qkT = jnp.einsum('bhqc,bhkc->bhqk', q, k)
    qkT = qkT.transpose(0, 3, 2, 1)                                # b k q h
    v = jnp.einsum('bnc,cd->bnd', xf, params['wv'])
    attn_scale = params['attn_scale'].reshape(K, K, 1, n_q * hdim)
    rpb = params['rpb_table'].reshape(K, K, 1, n_q * hdim)
    if qna_activation == 'exp':
      cost_exp = jnp.exp(qkT - qkT.max())
      rpb_exp = jnp.exp(rpb - rpb.max())
    elif qna_activation == 'sigmoid':
      cost_exp = jax.nn.sigmoid(qkT)
      rpb_exp = jax.nn.sigmoid(rpb)
    else:
      cost_exp = qkT
      rpb_exp = rpb
    v_cost_exp = cost_exp[..., None] * v.reshape(B, N, 1, hdim, hc)
    v_cost_exp = v_cost_exp.reshape(B, N, Cnum)
    summation_kernel = jnp.repeat(rpb_exp * attn_scale, hc, axis=3)
    v_ = v_cost_exp.reshape(B, H, W, Cnum).transpose(0, 3, 1, 2)
    v_kern = summation_kernel.transpose(3, 2, 0, 1)
    sum_num = lax.conv_general_dilated(
        v_, v_kern, (s, s), [(P, P), (P, P)],
        dimension_numbers=('NCHW', 'OIHW', 'NCHW'), feature_group_count=Cnum)
    Ho, Wo = H // s, W // s
    sum_num = sum_num.reshape(B, n_q, hdim, hc, Ho, Wo)
    cost_ = cost_exp.reshape(B, H, W, n_q * hdim).transpose(0, 3, 1, 2)
    kern_ = rpb_exp.transpose(3, 2, 0, 1)
    sum_den = lax.conv_general_dilated(
        cost_, kern_, (s, s), [(P, P), (P, P)],
        dimension_numbers=('NCHW', 'OIHW', 'NCHW'),
        feature_group_count=n_q * hdim)
    sum_den = sum_den.reshape(B, n_q, hdim, 1, Ho, Wo)
    out = (sum_num / sum_den).sum(axis=1).reshape(B, Cs, Ho, Wo)
    out = jnp.einsum('oc,bchw->bohw', params['wout'], out)
  return out


if __name__ == "__main__":
  n_q, C, n_heads, ksize, stride, padding = 2, 8, 2, 3, 1, 1
  qna_activation = 'exp'
  B, H, W = 2, 8, 8

  key = jax.random.PRNGKey(0)
  kp, kx = jax.random.split(key)
  params = make_params(kp, n_q, C, n_heads, ksize, stride)
  x = jax.random.normal(kx, (B, C, H, W), jnp.float32)

  out, _, _ = fused_kqna_forward(
      x, params, n_q=n_q, n_heads=n_heads, ksize=ksize, stride=stride,
      padding=padding, qna_activation=qna_activation)
  out = jax.block_until_ready(out)

  ref = fused_kqna_reference(
      x, params, n_q=n_q, n_heads=n_heads, ksize=ksize, stride=stride,
      padding=padding, qna_activation=qna_activation)
  assert out.shape == ref.shape, (out.shape, ref.shape)
  max_err = float(jnp.max(jnp.abs(out - ref)))
  if not bool(jnp.allclose(out, ref, rtol=2e-3, atol=2e-3)):
    raise AssertionError(f"kernel/reference mismatch, max abs err = {max_err}")
  print("KERNEL_OK")
</pallas_src>

<mosaic_0001>
module attributes {stable_mosaic.version = 11 : i64} {
  func.func @_fused_kqna_kernel(%arg0: i32, %arg1: memref<1x64x8xf32, #tpu.memory_space<vmem>>, %arg2: memref<8x16xf32, #tpu.memory_space<vmem>>, %arg3: memref<8x4xf32, #tpu.memory_space<vmem>>, %arg4: memref<2x8xf32, #tpu.memory_space<vmem>>, %arg5: memref<9x16xf32, #tpu.memory_space<vmem>>, %arg6: memref<9x4xf32, #tpu.memory_space<vmem>>, %arg7: memref<8x8xf32, #tpu.memory_space<vmem>>, %arg8: memref<1x64x8xf32, #tpu.memory_space<vmem>>, %arg9: memref<10x10x4xf32, #tpu.memory_space<vmem>>, %arg10: memref<10x10x8xf32, #tpu.memory_space<vmem>>) attributes {dimension_semantics = [#tpu.dimension_semantics<parallel>], iteration_bounds = array<i64: 2>, scalar_prefetch = 0 : i64, scratch_operands = 2 : i64, tpu.core_type = #tpu.core_type<tc>, window_params = [{transform_indices = @transform_0, window_bounds = array<i64: 1, 64, 8>}, {pipeline_mode = #tpu.pipeline_mode<synchronous>, transform_indices = @transform_1, window_bounds = array<i64: 8, 16>}, {pipeline_mode = #tpu.pipeline_mode<synchronous>, transform_indices = @transform_2, window_bounds = array<i64: 8, 4>}, {pipeline_mode = #tpu.pipeline_mode<synchronous>, transform_indices = @transform_3, window_bounds = array<i64: 2, 8>}, {pipeline_mode = #tpu.pipeline_mode<synchronous>, transform_indices = @transform_4, window_bounds = array<i64: 9, 16>}, {pipeline_mode = #tpu.pipeline_mode<synchronous>, transform_indices = @transform_5, window_bounds = array<i64: 9, 4>}, {pipeline_mode = #tpu.pipeline_mode<synchronous>, transform_indices = @transform_6, window_bounds = array<i64: 8, 8>}, {transform_indices = @transform_7, window_bounds = array<i64: 1, 64, 8>}]} {
    %c0 = arith.constant 0 : index
    %c0_0 = arith.constant 0 : index
    %c0_1 = arith.constant 0 : index
    %0 = vector.load %arg1[%c0, %c0_0, %c0_1] : memref<1x64x8xf32, #tpu.memory_space<vmem>>, vector<1x64x8xf32>
    %1 = vector.shape_cast %0 : vector<1x64x8xf32> to vector<64x8xf32>
    %c0_2 = arith.constant 0 : index
    %c0_3 = arith.constant 0 : index
    %2 = vector.load %arg2[%c0_2, %c0_3] : memref<8x16xf32, #tpu.memory_space<vmem>>, vector<8x16xf32>
    %cst = arith.constant dense<0.000000e+00> : vector<64x16xf32>
    %3 = tpu.matmul %1, %2, %cst {dimension_numbers = #tpu.dot_dimension_numbers<[1], [0], [0], [1], [0, 0, 1, 1], [], []>} : vector<64x8xf32>, vector<8x16xf32>, vector<64x16xf32> -> vector<64x16xf32>
    %4 = vector.extract_strided_slice %3 {offsets = [0, 0], sizes = [64, 8], strides = [1, 1]} : vector<64x16xf32> to vector<64x8xf32>
    %5 = vector.extract_strided_slice %3 {offsets = [0, 8], sizes = [64, 8], strides = [1, 1]} : vector<64x16xf32> to vector<64x8xf32>
    %c0_4 = arith.constant 0 : index
    %c0_5 = arith.constant 0 : index
    %6 = vector.load %arg3[%c0_4, %c0_5] : memref<8x4xf32, #tpu.memory_space<vmem>>, vector<8x4xf32>
    %cst_6 = arith.constant dense<0.000000e+00> : vector<64x4xf32>
    %7 = tpu.matmul %4, %6, %cst_6 {dimension_numbers = #tpu.dot_dimension_numbers<[1], [0], [0], [1], [0, 0, 1, 1], [], []>} : vector<64x8xf32>, vector<8x4xf32>, vector<64x4xf32> -> vector<64x4xf32>
    %8 = vector.shape_cast %7 : vector<64x4xf32> to vector<1x64x4xf32>
    %cst_7 = arith.constant dense<0xFF800000> : vector<1xf32>
    %9 = vector.multi_reduction <maximumf>, %8, %cst_7 [1, 2] : vector<1x64x4xf32> to vector<1xf32>
    %10 = vector.shape_cast %9 : vector<1xf32> to vector<1x1x1xf32>
    %11 = vector.extract %10[0, 0, 0] : f32 from vector<1x1x1xf32>
    %12 = vector.broadcast %11 : f32 to vector<64x4xf32>
    %13 = arith.subf %7, %12 : vector<64x4xf32>
    %14 = math.exp %13 : vector<64x4xf32>
    %cst_8 = arith.constant 0.000000e+00 : f32
    %15 = vector.broadcast %cst_8 : f32 to vector<1x10x4xf32>
    %c0_9 = arith.constant 0 : index
    %c0_10 = arith.constant 0 : index
    %c0_11 = arith.constant 0 : index
    %16 = vector.load %arg9[%c0_9, %c0_10, %c0_11] : memref<10x10x4xf32, #tpu.memory_space<vmem>>, vector<1x10x4xf32>
    tpu.vector_store %arg9[%c0_9, %c0_10, %c0_11], %15 {strides = array<i32>} : memref<10x10x4xf32, #tpu.memory_space<vmem>>, vector<1x10x4xf32>,
    %cst_12 = arith.constant 0.000000e+00 : f32
    %17 = vector.broadcast %cst_12 : f32 to vector<1x10x4xf32>
    %c9 = arith.constant 9 : index
    %c0_13 = arith.constant 0 : index
    %c0_14 = arith.constant 0 : index
    %18 = vector.load %arg9[%c9, %c0_13, %c0_14] : memref<10x10x4xf32, #tpu.memory_space<vmem>>, vector<1x10x4xf32>
    tpu.vector_store %arg9[%c9, %c0_13, %c0_14], %17 {strides = array<i32>} : memref<10x10x4xf32, #tpu.memory_space<vmem>>, vector<1x10x4xf32>,
    %cst_15 = arith.constant 0.000000e+00 : f32
    %19 = vector.broadcast %cst_15 : f32 to vector<8x1x4xf32>
    %c1 = arith.constant 1 : index
    %c0_16 = arith.constant 0 : index
    %c0_17 = arith.constant 0 : index
    %20 = vector.load %arg9[%c1, %c0_16, %c0_17] : memref<10x10x4xf32, #tpu.memory_space<vmem>>, vector<8x1x4xf32>
    tpu.vector_store %arg9[%c1, %c0_16, %c0_17], %19 {strides = array<i32>} : memref<10x10x4xf32, #tpu.memory_space<vmem>>, vector<8x1x4xf32>,
    %cst_18 = arith.constant 0.000000e+00 : f32
    %21 = vector.broadcast %cst_18 : f32 to vector<8x1x4xf32>
    %c1_19 = arith.constant 1 : index
    %c9_20 = arith.constant 9 : index
    %c0_21 = arith.constant 0 : index
    %22 = vector.load %arg9[%c1_19, %c9_20, %c0_21] : memref<10x10x4xf32, #tpu.memory_space<vmem>>, vector<8x1x4xf32>
    tpu.vector_store %arg9[%c1_19, %c9_20, %c0_21], %21 {strides = array<i32>} : memref<10x10x4xf32, #tpu.memory_space<vmem>>, vector<8x1x4xf32>,
    %cst_22 = arith.constant 0.000000e+00 : f32
    %23 = vector.broadcast %cst_22 : f32 to vector<1x10x8xf32>
    %c0_23 = arith.constant 0 : index
    %c0_24 = arith.constant 0 : index
    %c0_25 = arith.constant 0 : index
    %24 = vector.load %arg10[%c0_23, %c0_24, %c0_25] : memref<10x10x8xf32, #tpu.memory_space<vmem>>, vector<1x10x8xf32>
    tpu.vector_store %arg10[%c0_23, %c0_24, %c0_25], %23 {strides = array<i32>} : memref<10x10x8xf32, #tpu.memory_space<vmem>>, vector<1x10x8xf32>,
    %cst_26 = arith.constant 0.000000e+00 : f32
    %25 = vector.broadcast %cst_26 : f32 to vector<1x10x8xf32>
    %c9_27 = arith.constant 9 : index
    %c0_28 = arith.constant 0 : index
    %c0_29 = arith.constant 0 : index
    %26 = vector.load %arg10[%c9_27, %c0_28, %c0_29] : memref<10x10x8xf32, #tpu.memory_space<vmem>>, vector<1x10x8xf32>
    tpu.vector_store %arg10[%c9_27, %c0_28, %c0_29], %25 {strides = array<i32>} : memref<10x10x8xf32, #tpu.memory_space<vmem>>, vector<1x10x8xf32>,
    %cst_30 = arith.constant 0.000000e+00 : f32
    %27 = vector.broadcast %cst_30 : f32 to vector<8x1x8xf32>
    %c1_31 = arith.constant 1 : index
    %c0_32 = arith.constant 0 : index
    %c0_33 = arith.constant 0 : index
    %28 = vector.load %arg10[%c1_31, %c0_32, %c0_33] : memref<10x10x8xf32, #tpu.memory_space<vmem>>, vector<8x1x8xf32>
    tpu.vector_store %arg10[%c1_31, %c0_32, %c0_33], %27 {strides = array<i32>} : memref<10x10x8xf32, #tpu.memory_space<vmem>>, vector<8x1x8xf32>,
    %cst_34 = arith.constant 0.000000e+00 : f32
    %29 = vector.broadcast %cst_34 : f32 to vector<8x1x8xf32>
    %c1_35 = arith.constant 1 : index
    %c9_36 = arith.constant 9 : index
    %c0_37 = arith.constant 0 : index
    %30 = vector.load %arg10[%c1_35, %c9_36, %c0_37] : memref<10x10x8xf32, #tpu.memory_space<vmem>>, vector<8x1x8xf32>
    tpu.vector_store %arg10[%c1_35, %c9_36, %c0_37], %29 {strides = array<i32>} : memref<10x10x8xf32, #tpu.memory_space<vmem>>, vector<8x1x8xf32>,
    %31 = vector.shape_cast %14 : vector<64x4xf32> to vector<8x8x4xf32>
    %c1_38 = arith.constant 1 : index
    %c1_39 = arith.constant 1 : index
    %c0_40 = arith.constant 0 : index
    %32 = vector.load %arg9[%c1_38, %c1_39, %c0_40] : memref<10x10x4xf32, #tpu.memory_space<vmem>>, vector<8x8x4xf32>
    tpu.vector_store %arg9[%c1_38, %c1_39, %c0_40], %31 {strides = array<i32>} : memref<10x10x4xf32, #tpu.memory_space<vmem>>, vector<8x8x4xf32>,
    %cst_41 = arith.constant 0.000000e+00 : f32
    %33 = vector.broadcast %cst_41 : f32 to vector<8x8x4xf32>
    %c0_42 = arith.constant 0 : index
    %c0_43 = arith.constant 0 : index
    %c0_44 = arith.constant 0 : index
    %34 = vector.load %arg9[%c0_42, %c0_43, %c0_44] : memref<10x10x4xf32, #tpu.memory_space<vmem>>, vector<8x8x4xf32>
    %c0_45 = arith.constant 0 : index
    %c0_46 = arith.constant 0 : index
    %35 = vector.load %arg6[%c0_45, %c0_46] : memref<9x4xf32, #tpu.memory_space<vmem>>, vector<1x4xf32>
    %36 = vector.shape_cast %35 : vector<1x4xf32> to vector<1x1x4xf32>
    %37 = vector.broadcast %36 : vector<1x1x4xf32> to vector<8x8x4xf32>
    %38 = arith.mulf %34, %37 : vector<8x8x4xf32>
    %39 = arith.addf %33, %38 : vector<8x8x4xf32>
    %c0_47 = arith.constant 0 : index
    %c1_48 = arith.constant 1 : index
    %c0_49 = arith.constant 0 : index
    %40 = vector.load %arg9[%c0_47, %c1_48, %c0_49] : memref<10x10x4xf32, #tpu.memory_space<vmem>>, vector<8x8x4xf32>
    %c1_50 = arith.constant 1 : index
    %c0_51 = arith.constant 0 : index
    %41 = vector.load %arg6[%c1_50, %c0_51] : memref<9x4xf32, #tpu.memory_space<vmem>>, vector<1x4xf32>
    %42 = vector.shape_cast %41 : vector<1x4xf32> to vector<1x1x4xf32>
    %43 = vector.broadcast %42 : vector<1x1x4xf32> to vector<8x8x4xf32>
    %44 = arith.mulf %40, %43 : vector<8x8x4xf32>
    %45 = arith.addf %39, %44 : vector<8x8x4xf32>
    %c0_52 = arith.constant 0 : index
    %c2 = arith.constant 2 : index
    %c0_53 = arith.constant 0 : index
    %46 = vector.load %arg9[%c0_52, %c2, %c0_53] : memref<10x10x4xf32, #tpu.memory_space<vmem>>, vector<8x8x4xf32>
    %c2_54 = arith.constant 2 : index
    %c0_55 = arith.constant 0 : index
    %47 = vector.load %arg6[%c2_54, %c0_55] : memref<9x4xf32, #tpu.memory_space<vmem>>, vector<1x4xf32>
    %48 = vector.shape_cast %47 : vector<1x4xf32> to vector<1x1x4xf32>
    %49 = vector.broadcast %48 : vector<1x1x4xf32> to vector<8x8x4xf32>
    %50 = arith.mulf %46, %49 : vector<8x8x4xf32>
    %51 = arith.addf %45, %50 : vector<8x8x4xf32>
    %c1_56 = arith.constant 1 : index
    %c0_57 = arith.constant 0 : index
    %c0_58 = arith.constant 0 : index
    %52 = vector.load %arg9[%c1_56, %c0_57, %c0_58] : memref<10x10x4xf32, #tpu.memory_space<vmem>>, vector<8x8x4xf32>
    %c3 = arith.constant 3 : index
    %c0_59 = arith.constant 0 : index
    %53 = vector.load %arg6[%c3, %c0_59] : memref<9x4xf32, #tpu.memory_space<vmem>>, vector<1x4xf32>
    %54 = vector.shape_cast %53 : vector<1x4xf32> to vector<1x1x4xf32>
    %55 = vector.broadcast %54 : vector<1x1x4xf32> to vector<8x8x4xf32>
    %56 = arith.mulf %52, %55 : vector<8x8x4xf32>
    %57 = arith.addf %51, %56 : vector<8x8x4xf32>
    %c1_60 = arith.constant 1 : index
    %c1_61 = arith.constant 1 : index
    %c0_62 = arith.constant 0 : index
    %58 = vector.load %arg9[%c1_60, %c1_61, %c0_62] : memref<10x10x4xf32, #tpu.memory_space<vmem>>, vector<8x8x4xf32>
    %c4 = arith.constant 4 : index
    %c0_63 = arith.constant 0 : index
    %59 = vector.load %arg6[%c4, %c0_63] : memref<9x4xf32, #tpu.memory_space<vmem>>, vector<1x4xf32>
    %60 = vector.shape_cast %59 : vector<1x4xf32> to vector<1x1x4xf32>
    %61 = vector.broadcast %60 : vector<1x1x4xf32> to vector<8x8x4xf32>
    %62 = arith.mulf %58, %61 : vector<8x8x4xf32>
    %63 = arith.addf %57, %62 : vector<8x8x4xf32>
    %c1_64 = arith.constant 1 : index
    %c2_65 = arith.constant 2 : index
    %c0_66 = arith.constant 0 : index
    %64 = vector.load %arg9[%c1_64, %c2_65, %c0_66] : memref<10x10x4xf32, #tpu.memory_space<vmem>>, vector<8x8x4xf32>
    %c5 = arith.constant 5 : index
    %c0_67 = arith.constant 0 : index
    %65 = vector.load %arg6[%c5, %c0_67] : memref<9x4xf32, #tpu.memory_space<vmem>>, vector<1x4xf32>
    %66 = vector.shape_cast %65 : vector<1x4xf32> to vector<1x1x4xf32>
    %67 = vector.broadcast %66 : vector<1x1x4xf32> to vector<8x8x4xf32>
    %68 = arith.mulf %64, %67 : vector<8x8x4xf32>
    %69 = arith.addf %63, %68 : vector<8x8x4xf32>
    %c2_68 = arith.constant 2 : index
    %c0_69 = arith.constant 0 : index
    %c0_70 = arith.constant 0 : index
    %70 = vector.load %arg9[%c2_68, %c0_69, %c0_70] : memref<10x10x4xf32, #tpu.memory_space<vmem>>, vector<8x8x4xf32>
    %c6 = arith.constant 6 : index
    %c0_71 = arith.constant 0 : index
    %71 = vector.load %arg6[%c6, %c0_71] : memref<9x4xf32, #tpu.memory_space<vmem>>, vector<1x4xf32>
    %72 = vector.shape_cast %71 : vector<1x4xf32> to vector<1x1x4xf32>
    %73 = vector.broadcast %72 : vector<1x1x4xf32> to vector<8x8x4xf32>
    %74 = arith.mulf %70, %73 : vector<8x8x4xf32>
    %75 = arith.addf %69, %74 : vector<8x8x4xf32>
    %c2_72 = arith.constant 2 : index
    %c1_73 = arith.constant 1 : index
    %c0_74 = arith.constant 0 : index
    %76 = vector.load %arg9[%c2_72, %c1_73, %c0_74] : memref<10x10x4xf32, #tpu.memory_space<vmem>>, vector<8x8x4xf32>
    %c7 = arith.constant 7 : index
    %c0_75 = arith.constant 0 : index
    %77 = vector.load %arg6[%c7, %c0_75] : memref<9x4xf32, #tpu.memory_space<vmem>>, vector<1x4xf32>
    %78 = vector.shape_cast %77 : vector<1x4xf32> to vector<1x1x4xf32>
    %79 = vector.broadcast %78 : vector<1x1x4xf32> to vector<8x8x4xf32>
    %80 = arith.mulf %76, %79 : vector<8x8x4xf32>
    %81 = arith.addf %75, %80 : vector<8x8x4xf32>
    %c2_76 = arith.constant 2 : index
    %c2_77 = arith.constant 2 : index
    %c0_78 = arith.constant 0 : index
    %82 = vector.load %arg9[%c2_76, %c2_77, %c0_78] : memref<10x10x4xf32, #tpu.memory_space<vmem>>, vector<8x8x4xf32>
    %c8 = arith.constant 8 : index
    %c0_79 = arith.constant 0 : index
    %83 = vector.load %arg6[%c8, %c0_79] : memref<9x4xf32, #tpu.memory_space<vmem>>, vector<1x4xf32>
    %84 = vector.shape_cast %83 : vector<1x4xf32> to vector<1x1x4xf32>
    %85 = vector.broadcast %84 : vector<1x1x4xf32> to vector<8x8x4xf32>
    %86 = arith.mulf %82, %85 : vector<8x8x4xf32>
    %87 = arith.addf %81, %86 : vector<8x8x4xf32>
    %88 = tpu.reciprocal %87 : vector<8x8x4xf32> -> vector<8x8x4xf32>
    %89 = vector.shape_cast %88 : vector<8x8x4xf32> to vector<64x4xf32>
    %c0_80 = arith.constant 0 : index
    %c0_81 = arith.constant 0 : index
    %90 = vector.load %arg4[%c0_80, %c0_81] : memref<2x8xf32, #tpu.memory_space<vmem>>, vector<2x8xf32>
    %cst_82 = arith.constant 0.000000e+00 : f32
    %91 = vector.broadcast %cst_82 : f32 to vector<64x8xf32>
    %92 = vector.extract_strided_slice %14 {offsets = [0, 0], sizes = [64, 2], strides = [1, 1]} : vector<64x4xf32> to vector<64x2xf32>
    %cst_83 = arith.constant dense<0.000000e+00> : vector<64x8xf32>
    %93 = tpu.matmul %92, %90, %cst_83 {dimension_numbers = #tpu.dot_dimension_numbers<[1], [0], [0], [1], [0, 0, 1, 1], [], []>} : vector<64x2xf32>, vector<2x8xf32>, vector<64x8xf32> -> vector<64x8xf32>
    %94 = arith.mulf %93, %5 : vector<64x8xf32>
    %95 = vector.shape_cast %94 : vector<64x8xf32> to vector<8x8x8xf32>
    %c1_84 = arith.constant 1 : index
    %c1_85 = arith.constant 1 : index
    %c0_86 = arith.constant 0 : index
    %96 = vector.load %arg10[%c1_84, %c1_85, %c0_86] : memref<10x10x8xf32, #tpu.memory_space<vmem>>, vector<8x8x8xf32>
    tpu.vector_store %arg10[%c1_84, %c1_85, %c0_86], %95 {strides = array<i32>} : memref<10x10x8xf32, #tpu.memory_space<vmem>>, vector<8x8x8xf32>,
    %cst_87 = arith.constant 0.000000e+00 : f32
    %97 = vector.broadcast %cst_87 : f32 to vector<8x8x8xf32>
    %c0_88 = arith.constant 0 : index
    %c0_89 = arith.constant 0 : index
    %c0_90 = arith.constant 0 : index
    %98 = vector.load %arg10[%c0_88, %c0_89, %c0_90] : memref<10x10x8xf32, #tpu.memory_space<vmem>>, vector<8x8x8xf32>
    %c0_91 = arith.constant 0 : index
    %c0_92 = arith.constant 0 : index
    %99 = vector.load %arg5[%c0_91, %c0_92] : memref<9x16xf32, #tpu.memory_space<vmem>>, vector<1x8xf32>
    %100 = vector.shape_cast %99 : vector<1x8xf32> to vector<1x1x8xf32>
    %101 = vector.broadcast %100 : vector<1x1x8xf32> to vector<8x8x8xf32>
    %102 = arith.mulf %98, %101 : vector<8x8x8xf32>
    %103 = arith.addf %97, %102 : vector<8x8x8xf32>
    %c0_93 = arith.constant 0 : index
    %c1_94 = arith.constant 1 : index
    %c0_95 = arith.constant 0 : index
    %104 = vector.load %arg10[%c0_93, %c1_94, %c0_95] : memref<10x10x8xf32, #tpu.memory_space<vmem>>, vector<8x8x8xf32>
    %c1_96 = arith.constant 1 : index
    %c0_97 = arith.constant 0 : index
    %105 = vector.load %arg5[%c1_96, %c0_97] : memref<9x16xf32, #tpu.memory_space<vmem>>, vector<1x8xf32>
    %106 = vector.shape_cast %105 : vector<1x8xf32> to vector<1x1x8xf32>
    %107 = vector.broadcast %106 : vector<1x1x8xf32> to vector<8x8x8xf32>
    %108 = arith.mulf %104, %107 : vector<8x8x8xf32>
    %109 = arith.addf %103, %108 : vector<8x8x8xf32>
    %c0_98 = arith.constant 0 : index
    %c2_99 = arith.constant 2 : index
    %c0_100 = arith.constant 0 : index
    %110 = vector.load %arg10[%c0_98, %c2_99, %c0_100] : memref<10x10x8xf32, #tpu.memory_space<vmem>>, vector<8x8x8xf32>
    %c2_101 = arith.constant 2 : index
    %c0_102 = arith.constant 0 : index
    %111 = vector.load %arg5[%c2_101, %c0_102] : memref<9x16xf32, #tpu.memory_space<vmem>>, vector<1x8xf32>
    %112 = vector.shape_cast %111 : vector<1x8xf32> to vector<1x1x8xf32>
    %113 = vector.broadcast %112 : vector<1x1x8xf32> to vector<8x8x8xf32>
    %114 = arith.mulf %110, %113 : vector<8x8x8xf32>
    %115 = arith.addf %109, %114 : vector<8x8x8xf32>
    %c1_103 = arith.constant 1 : index
    %c0_104 = arith.constant 0 : index
    %c0_105 = arith.constant 0 : index
    %116 = vector.load %arg10[%c1_103, %c0_104, %c0_105] : memref<10x10x8xf32, #tpu.memory_space<vmem>>, vector<8x8x8xf32>
    %c3_106 = arith.constant 3 : index
    %c0_107 = arith.constant 0 : index
    %117 = vector.load %arg5[%c3_106, %c0_107] : memref<9x16xf32, #tpu.memory_space<vmem>>, vector<1x8xf32>
    %118 = vector.shape_cast %117 : vector<1x8xf32> to vector<1x1x8xf32>
    %119 = vector.broadcast %118 : vector<1x1x8xf32> to vector<8x8x8xf32>
    %120 = arith.mulf %116, %119 : vector<8x8x8xf32>
    %121 = arith.addf %115, %120 : vector<8x8x8xf32>
    %c1_108 = arith.constant 1 : index
    %c1_109 = arith.constant 1 : index
    %c0_110 = arith.constant 0 : index
    %122 = vector.load %arg10[%c1_108, %c1_109, %c0_110] : memref<10x10x8xf32, #tpu.memory_space<vmem>>, vector<8x8x8xf32>
    %c4_111 = arith.constant 4 : index
    %c0_112 = arith.constant 0 : index
    %123 = vector.load %arg5[%c4_111, %c0_112] : memref<9x16xf32, #tpu.memory_space<vmem>>, vector<1x8xf32>
    %124 = vector.shape_cast %123 : vector<1x8xf32> to vector<1x1x8xf32>
    %125 = vector.broadcast %124 : vector<1x1x8xf32> to vector<8x8x8xf32>
    %126 = arith.mulf %122, %125 : vector<8x8x8xf32>
    %127 = arith.addf %121, %126 : vector<8x8x8xf32>
    %c1_113 = arith.constant 1 : index
    %c2_114 = arith.constant 2 : index
    %c0_115 = arith.constant 0 : index
    %128 = vector.load %arg10[%c1_113, %c2_114, %c0_115] : memref<10x10x8xf32, #tpu.memory_space<vmem>>, vector<8x8x8xf32>
    %c5_116 = arith.constant 5 : index
    %c0_117 = arith.constant 0 : index
    %129 = vector.load %arg5[%c5_116, %c0_117] : memref<9x16xf32, #tpu.memory_space<vmem>>, vector<1x8xf32>
    %130 = vector.shape_cast %129 : vector<1x8xf32> to vector<1x1x8xf32>
    %131 = vector.broadcast %130 : vector<1x1x8xf32> to vector<8x8x8xf32>
    %132 = arith.mulf %128, %131 : vector<8x8x8xf32>
    %133 = arith.addf %127, %132 : vector<8x8x8xf32>
    %c2_118 = arith.constant 2 : index
    %c0_119 = arith.constant 0 : index
    %c0_120 = arith.constant 0 : index
    %134 = vector.load %arg10[%c2_118, %c0_119, %c0_120] : memref<10x10x8xf32, #tpu.memory_space<vmem>>, vector<8x8x8xf32>
    %c6_121 = arith.constant 6 : index
    %c0_122 = arith.constant 0 : index
    %135 = vector.load %arg5[%c6_121, %c0_122] : memref<9x16xf32, #tpu.memory_space<vmem>>, vector<1x8xf32>
    %136 = vector.shape_cast %135 : vector<1x8xf32> to vector<1x1x8xf32>
    %137 = vector.broadcast %136 : vector<1x1x8xf32> to vector<8x8x8xf32>
    %138 = arith.mulf %134, %137 : vector<8x8x8xf32>
    %139 = arith.addf %133, %138 : vector<8x8x8xf32>
    %c2_123 = arith.constant 2 : index
    %c1_124 = arith.constant 1 : index
    %c0_125 = arith.constant 0 : index
    %140 = vector.load %arg10[%c2_123, %c1_124, %c0_125] : memref<10x10x8xf32, #tpu.memory_space<vmem>>, vector<8x8x8xf32>
    %c7_126 = arith.constant 7 : index
    %c0_127 = arith.constant 0 : index
    %141 = vector.load %arg5[%c7_126, %c0_127] : memref<9x16xf32, #tpu.memory_space<vmem>>, vector<1x8xf32>
    %142 = vector.shape_cast %141 : vector<1x8xf32> to vector<1x1x8xf32>
    %143 = vector.broadcast %142 : vector<1x1x8xf32> to vector<8x8x8xf32>
    %144 = arith.mulf %140, %143 : vector<8x8x8xf32>
    %145 = arith.addf %139, %144 : vector<8x8x8xf32>
    %c2_128 = arith.constant 2 : index
    %c2_129 = arith.constant 2 : index
    %c0_130 = arith.constant 0 : index
    %146 = vector.load %arg10[%c2_128, %c2_129, %c0_130] : memref<10x10x8xf32, #tpu.memory_space<vmem>>, vector<8x8x8xf32>
    %c8_131 = arith.constant 8 : index
    %c0_132 = arith.constant 0 : index
    %147 = vector.load %arg5[%c8_131, %c0_132] : memref<9x16xf32, #tpu.memory_space<vmem>>, vector<1x8xf32>
    %148 = vector.shape_cast %147 : vector<1x8xf32> to vector<1x1x8xf32>
    %149 = vector.broadcast %148 : vector<1x1x8xf32> to vector<8x8x8xf32>
    %150 = arith.mulf %146, %149 : vector<8x8x8xf32>
    %151 = arith.addf %145, %150 : vector<8x8x8xf32>
    %152 = vector.extract_strided_slice %89 {offsets = [0, 0], sizes = [64, 2], strides = [1, 1]} : vector<64x4xf32> to vector<64x2xf32>
    %cst_133 = arith.constant dense<0.000000e+00> : vector<64x8xf32>
    %153 = tpu.matmul %152, %90, %cst_133 {dimension_numbers = #tpu.dot_dimension_numbers<[1], [0], [0], [1], [0, 0, 1, 1], [], []>} : vector<64x2xf32>, vector<2x8xf32>, vector<64x8xf32> -> vector<64x8xf32>
    %154 = vector.shape_cast %151 : vector<8x8x8xf32> to vector<64x8xf32>
    %155 = arith.mulf %154, %153 : vector<64x8xf32>
    %156 = arith.addf %91, %155 : vector<64x8xf32>
    %157 = vector.extract_strided_slice %14 {offsets = [0, 2], sizes = [64, 2], strides = [1, 1]} : vector<64x4xf32> to vector<64x2xf32>
    %cst_134 = arith.constant dense<0.000000e+00> : vector<64x8xf32>
    %158 = tpu.matmul %157, %90, %cst_134 {dimension_numbers = #tpu.dot_dimension_numbers<[1], [0], [0], [1], [0, 0, 1, 1], [], []>} : vector<64x2xf32>, vector<2x8xf32>, vector<64x8xf32> -> vector<64x8xf32>
    %159 = arith.mulf %158, %5 : vector<64x8xf32>
    %160 = vector.shape_cast %159 : vector<64x8xf32> to vector<8x8x8xf32>
    %c1_135 = arith.constant 1 : index
    %c1_136 = arith.constant 1 : index
    %c0_137 = arith.constant 0 : index
    %161 = vector.load %arg10[%c1_135, %c1_136, %c0_137] : memref<10x10x8xf32, #tpu.memory_space<vmem>>, vector<8x8x8xf32>
    tpu.vector_store %arg10[%c1_135, %c1_136, %c0_137], %160 {strides = array<i32>} : memref<10x10x8xf32, #tpu.memory_space<vmem>>, vector<8x8x8xf32>,
    %cst_138 = arith.constant 0.000000e+00 : f32
    %162 = vector.broadcast %cst_138 : f32 to vector<8x8x8xf32>
    %c0_139 = arith.constant 0 : index
    %c0_140 = arith.constant 0 : index
    %c0_141 = arith.constant 0 : index
    %163 = vector.load %arg10[%c0_139, %c0_140, %c0_141] : memref<10x10x8xf32, #tpu.memory_space<vmem>>, vector<8x8x8xf32>
    %c0_142 = arith.constant 0 : index
    %c8_143 = arith.constant 8 : index
    %164 = vector.load %arg5[%c0_142, %c8_143] : memref<9x16xf32, #tpu.memory_space<vmem>>, vector<1x8xf32>
    %165 = vector.shape_cast %164 : vector<1x8xf32> to vector<1x1x8xf32>
    %166 = vector.broadcast %165 : vector<1x1x8xf32> to vector<8x8x8xf32>
    %167 = arith.mulf %163, %166 : vector<8x8x8xf32>
    %168 = arith.addf %162, %167 : vector<8x8x8xf32>
    %c0_144 = arith.constant 0 : index
    %c1_145 = arith.constant 1 : index
    %c0_146 = arith.constant 0 : index
    %169 = vector.load %arg10[%c0_144, %c1_145, %c0_146] : memref<10x10x8xf32, #tpu.memory_space<vmem>>, vector<8x8x8xf32>
    %c1_147 = arith.constant 1 : index
    %c8_148 = arith.constant 8 : index
    %170 = vector.load %arg5[%c1_147, %c8_148] : memref<9x16xf32, #tpu.memory_space<vmem>>, vector<1x8xf32>
    %171 = vector.shape_cast %170 : vector<1x8xf32> to vector<1x1x8xf32>
    %172 = vector.broadcast %171 : vector<1x1x8xf32> to vector<8x8x8xf32>
    %173 = arith.mulf %169, %172 : vector<8x8x8xf32>
    %174 = arith.addf %168, %173 : vector<8x8x8xf32>
    %c0_149 = arith.constant 0 : index
    %c2_150 = arith.constant 2 : index
    %c0_151 = arith.constant 0 : index
    %175 = vector.load %arg10[%c0_149, %c2_150, %c0_151] : memref<10x10x8xf32, #tpu.memory_space<vmem>>, vector<8x8x8xf32>
    %c2_152 = arith.constant 2 : index
    %c8_153 = arith.constant 8 : index
    %176 = vector.load %arg5[%c2_152, %c8_153] : memref<9x16xf32, #tpu.memory_space<vmem>>, vector<1x8xf32>
    %177 = vector.shape_cast %176 : vector<1x8xf32> to vector<1x1x8xf32>
    %178 = vector.broadcast %177 : vector<1x1x8xf32> to vector<8x8x8xf32>
    %179 = arith.mulf %175, %178 : vector<8x8x8xf32>
    %180 = arith.addf %174, %179 : vector<8x8x8xf32>
    %c1_154 = arith.constant 1 : index
    %c0_155 = arith.constant 0 : index
    %c0_156 = arith.constant 0 : index
    %181 = vector.load %arg10[%c1_154, %c0_155, %c0_156] : memref<10x10x8xf32, #tpu.memory_space<vmem>>, vector<8x8x8xf32>
    %c3_157 = arith.constant 3 : index
    %c8_158 = arith.constant 8 : index
    %182 = vector.load %arg5[%c3_157, %c8_158] : memref<9x16xf32, #tpu.memory_space<vmem>>, vector<1x8xf32>
    %183 = vector.shape_cast %182 : vector<1x8xf32> to vector<1x1x8xf32>
    %184 = vector.broadcast %183 : vector<1x1x8xf32> to vector<8x8x8xf32>
    %185 = arith.mulf %181, %184 : vector<8x8x8xf32>
    %186 = arith.addf %180, %185 : vector<8x8x8xf32>
    %c1_159 = arith.constant 1 : index
    %c1_160 = arith.constant 1 : index
    %c0_161 = arith.constant 0 : index
    %187 = vector.load %arg10[%c1_159, %c1_160, %c0_161] : memref<10x10x8xf32, #tpu.memory_space<vmem>>, vector<8x8x8xf32>
    %c4_162 = arith.constant 4 : index
    %c8_163 = arith.constant 8 : index
    %188 = vector.load %arg5[%c4_162, %c8_163] : memref<9x16xf32, #tpu.memory_space<vmem>>, vector<1x8xf32>
    %189 = vector.shape_cast %188 : vector<1x8xf32> to vector<1x1x8xf32>
    %190 = vector.broadcast %189 : vector<1x1x8xf32> to vector<8x8x8xf32>
    %191 = arith.mulf %187, %190 : vector<8x8x8xf32>
    %192 = arith.addf %186, %191 : vector<8x8x8xf32>
    %c1_164 = arith.constant 1 : index
    %c2_165 = arith.constant 2 : index
    %c0_166 = arith.constant 0 : index
    %193 = vector.load %arg10[%c1_164, %c2_165, %c0_166] : memref<10x10x8xf32, #tpu.memory_space<vmem>>, vector<8x8x8xf32>
    %c5_167 = arith.constant 5 : index
    %c8_168 = arith.constant 8 : index
    %194 = vector.load %arg5[%c5_167, %c8_168] : memref<9x16xf32, #tpu.memory_space<vmem>>, vector<1x8xf32>
    %195 = vector.shape_cast %194 : vector<1x8xf32> to vector<1x1x8xf32>
    %196 = vector.broadcast %195 : vector<1x1x8xf32> to vector<8x8x8xf32>
    %197 = arith.mulf %193, %196 : vector<8x8x8xf32>
    %198 = arith.addf %192, %197 : vector<8x8x8xf32>
    %c2_169 = arith.constant 2 : index
    %c0_170 = arith.constant 0 : index
    %c0_171 = arith.constant 0 : index
    %199 = vector.load %arg10[%c2_169, %c0_170, %c0_171] : memref<10x10x8xf32, #tpu.memory_space<vmem>>, vector<8x8x8xf32>
    %c6_172 = arith.constant 6 : index
    %c8_173 = arith.constant 8 : index
    %200 = vector.load %arg5[%c6_172, %c8_173] : memref<9x16xf32, #tpu.memory_space<vmem>>, vector<1x8xf32>
    %201 = vector.shape_cast %200 : vector<1x8xf32> to vector<1x1x8xf32>
    %202 = vector.broadcast %201 : vector<1x1x8xf32> to vector<8x8x8xf32>
    %203 = arith.mulf %199, %202 : vector<8x8x8xf32>
    %204 = arith.addf %198, %203 : vector<8x8x8xf32>
    %c2_174 = arith.constant 2 : index
    %c1_175 = arith.constant 1 : index
    %c0_176 = arith.constant 0 : index
    %205 = vector.load %arg10[%c2_174, %c1_175, %c0_176] : memref<10x10x8xf32, #tpu.memory_space<vmem>>, vector<8x8x8xf32>
    %c7_177 = arith.constant 7 : index
    %c8_178 = arith.constant 8 : index
    %206 = vector.load %arg5[%c7_177, %c8_178] : memref<9x16xf32, #tpu.memory_space<vmem>>, vector<1x8xf32>
    %207 = vector.shape_cast %206 : vector<1x8xf32> to vector<1x1x8xf32>
    %208 = vector.broadcast %207 : vector<1x1x8xf32> to vector<8x8x8xf32>
    %209 = arith.mulf %205, %208 : vector<8x8x8xf32>
    %210 = arith.addf %204, %209 : vector<8x8x8xf32>
    %c2_179 = arith.constant 2 : index
    %c2_180 = arith.constant 2 : index
    %c0_181 = arith.constant 0 : index
    %211 = vector.load %arg10[%c2_179, %c2_180, %c0_181] : memref<10x10x8xf32, #tpu.memory_space<vmem>>, vector<8x8x8xf32>
    %c8_182 = arith.constant 8 : index
    %c8_183 = arith.constant 8 : index
    %212 = vector.load %arg5[%c8_182, %c8_183] : memref<9x16xf32, #tpu.memory_space<vmem>>, vector<1x8xf32>
    %213 = vector.shape_cast %212 : vector<1x8xf32> to vector<1x1x8xf32>
    %214 = vector.broadcast %213 : vector<1x1x8xf32> to vector<8x8x8xf32>
    %215 = arith.mulf %211, %214 : vector<8x8x8xf32>
    %216 = arith.addf %210, %215 : vector<8x8x8xf32>
    %217 = vector.extract_strided_slice %89 {offsets = [0, 2], sizes = [64, 2], strides = [1, 1]} : vector<64x4xf32> to vector<64x2xf32>
    %cst_184 = arith.constant dense<0.000000e+00> : vector<64x8xf32>
    %218 = tpu.matmul %217, %90, %cst_184 {dimension_numbers = #tpu.dot_dimension_numbers<[1], [0], [0], [1], [0, 0, 1, 1], [], []>} : vector<64x2xf32>, vector<2x8xf32>, vector<64x8xf32> -> vector<64x8xf32>
    %219 = vector.shape_cast %216 : vector<8x8x8xf32> to vector<64x8xf32>
    %220 = arith.mulf %219, %218 : vector<64x8xf32>
    %221 = arith.addf %156, %220 : vector<64x8xf32>
    %c0_185 = arith.constant 0 : index
    %c0_186 = arith.constant 0 : index
    %222 = vector.load %arg7[%c0_185, %c0_186] : memref<8x8xf32, #tpu.memory_space<vmem>>, vector<8x8xf32>
    %cst_187 = arith.constant dense<0.000000e+00> : vector<64x8xf32>
    %223 = tpu.matmul %221, %222, %cst_187 {dimension_numbers = #tpu.dot_dimension_numbers<[1], [0], [0], [1], [0, 0, 1, 1], [], []>} : vector<64x8xf32>, vector<8x8xf32>, vector<64x8xf32> -> vector<64x8xf32>
    %c0_188 = arith.constant 0 : index
    %c0_189 = arith.constant 0 : index
    %c0_190 = arith.constant 0 : index
    %224 = vector.load %arg8[%c0_188, %c0_189, %c0_190] : memref<1x64x8xf32, #tpu.memory_space<vmem>>, vector<1x64x8xf32>
    %225 = vector.shape_cast %224 : vector<1x64x8xf32> to vector<64x8xf32>
    %226 = vector.shape_cast %223 : vector<64x8xf32> to vector<1x64x8xf32>
    tpu.vector_store %arg8[%c0_188, %c0_189, %c0_190], %226 {strides = array<i32>} : memref<1x64x8xf32, #tpu.memory_space<vmem>>, vector<1x64x8xf32>,
    return
  }
  func.func @transform_0(%arg0: i32) -> (i32, i32, i32) {
    %c0_i32 = arith.constant 0 : i32
    %c0_i32_0 = arith.constant 0 : i32
    %c0_i32_1 = arith.constant 0 : i32
    return %arg0, %c0_i32, %c0_i32_0 : i32, i32, i32
  }
  func.func @transform_1(%arg0: i32) -> (i32, i32) {
    %c0_i32 = arith.constant 0 : i32
    %c0_i32_0 = arith.constant 0 : i32
    %c0_i32_1 = arith.constant 0 : i32
    return %c0_i32, %c0_i32_0 : i32, i32
  }
  func.func @transform_2(%arg0: i32) -> (i32, i32) {
    %c0_i32 = arith.constant 0 : i32
    %c0_i32_0 = arith.constant 0 : i32
    %c0_i32_1 = arith.constant 0 : i32
    return %c0_i32, %c0_i32_0 : i32, i32
  }
  func.func @transform_3(%arg0: i32) -> (i32, i32) {
    %c0_i32 = arith.constant 0 : i32
    %c0_i32_0 = arith.constant 0 : i32
    %c0_i32_1 = arith.constant 0 : i32
    return %c0_i32, %c0_i32_0 : i32, i32
  }
  func.func @transform_4(%arg0: i32) -> (i32, i32) {
    %c0_i32 = arith.constant 0 : i32
    %c0_i32_0 = arith.constant 0 : i32
    %c0_i32_1 = arith.constant 0 : i32
    return %c0_i32, %c0_i32_0 : i32, i32
  }
  func.func @transform_5(%arg0: i32) -> (i32, i32) {
    %c0_i32 = arith.constant 0 : i32
    %c0_i32_0 = arith.constant 0 : i32
    %c0_i32_1 = arith.constant 0 : i32
    return %c0_i32, %c0_i32_0 : i32, i32
  }
  func.func @transform_6(%arg0: i32) -> (i32, i32) {
    %c0_i32 = arith.constant 0 : i32
    %c0_i32_0 = arith.constant 0 : i32
    %c0_i32_1 = arith.constant 0 : i32
    return %c0_i32, %c0_i32_0 : i32, i32
  }
  func.func @transform_7(%arg0: i32) -> (i32, i32, i32) {
    %c0_i32 = arith.constant 0 : i32
    %c0_i32_0 = arith.constant 0 : i32
    %c0_i32_1 = arith.constant 0 : i32
    return %arg0, %c0_i32, %c0_i32_0 : i32, i32, i32
  }
}

</mosaic_0001>

<llo_original>
// kernel: tpu_custom_call.1
$region0: #{tpu_custom_call.1}
  #allocation0 [shape = 'u32[]', space=smem, size = 0x4, offset = 0x4, fixed_abs, tag = 'smem constant byte address 0x4 - core index']
  #allocation1 [shape = 'u32[144,128]{1,0:T(1,128)}', space=vmem, size = 0x12000, scoped, tag = 'internal scratch']
  #allocation2 [shape = 'f32[10,10,4]{2,1,0:T(8,128)}', space=vmem, size = 0x14000, scoped, tag = 'scratch operand']
  #allocation3 [shape = 'f32[10,10,8]{2,1,0:T(8,128)}', space=vmem, size = 0x14000, scoped, tag = 'scratch operand']
  %s0 = inlined_call_operand.vmem [shape: f32[2,64,8], index: 0, kind: input, shape index: {}]
  %s1 = inlined_call_operand.vmem [shape: f32[8,16], index: 1, kind: input, shape index: {}]
  %s2 = inlined_call_operand.vmem [shape: f32[8,4], index: 2, kind: input, shape index: {}]
  %s3 = inlined_call_operand.vmem [shape: f32[2,8], index: 3, kind: input, shape index: {}]
  %s4 = inlined_call_operand.vmem [shape: f32[9,16], index: 4, kind: input, shape index: {}]
  %s5 = inlined_call_operand.vmem [shape: f32[9,4], index: 5, kind: input, shape index: {}]
  %s6 = inlined_call_operand.vmem [shape: f32[8,8], index: 6, kind: input, shape index: {}]
  %s7 = inlined_call_operand.vmem [shape: f32[2,64,8], index: 7, kind: output, shape index: {}]
  %s8 = sld [smem:[#allocation0]]
  $region61: #{tpu_custom_call.1} parent=0
    _
  %s10 = ssub.s32 1, %s8
  %s11 = scalar_select 0, %s10, %s8
  loop: start=0, step=1, limit=4
  $region2: #{tpu_custom_call.1} parent=0 // loop_pre_header
    _
  $region3: #{tpu_custom_call.1} parent=0 // loop_header
    %s13 = sphi 0, %s17
    %p14 = scmp.ge.s32.totalorder %s13, 4
    %s23 = sphi 0, %s25
    %s26 = sphi 0, %s23
    %s27 = sphi 0, %s26
    %s43 = sphi 0, %s27
    %s47 = sphi 0, %s47
    %s49 = sphi 0, %s47
    %s50 = sphi 0, %s49
    %s64 = sphi 0, %s50
    %s68 = sphi 0, %s68
    %s70 = sphi 0, %s68
    %s71 = sphi 0, %s70
    %s85 = sphi 0, %s71
    %s89 = sphi 0, %s89
    %s91 = sphi 0, %s89
    %s92 = sphi 0, %s91
    %s106 = sphi 0, %s92
    %s110 = sphi 0, %s110
    %s112 = sphi 0, %s110
    %s113 = sphi 0, %s112
    %s127 = sphi 0, %s113
    %s131 = sphi 0, %s131
    %s133 = sphi 0, %s131
    %s134 = sphi 0, %s133
    %s148 = sphi 0, %s134
    %s152 = sphi 0, %s152
    %s154 = sphi 0, %s152
    %s155 = sphi 0, %s154
    %s169 = sphi 0, %s155
    %s175 = sphi 0, %s177
    %s178 = sphi 0, %s175
    %s179 = sphi 0, %s178
    %s195 = sphi 0, %s179
  $region4: #{tpu_custom_call.1} parent=0 // loop_header_branch
    %16 = sbr.rel (%p14) target = $region8
  $region5: #{tpu_custom_call.1} parent=0 // loop_body
    %s18 = ssub.s32 %s13, 1
    %s19 = ssub.s32 %s13, 2
    %s20 = sadd.s32 %s13, 1
    %s21 = ssub.s32 %s13, %s20
    %p22 = scmp.eq.s32.totalorder %s21, 0
    %s24 = sadd.s32 %s23, 1
    %s25 = scalar_select %p22, %s23, %s24
    %p28 = pneg %p22
    %p29 = scmp.eq.s32.totalorder %s13, 1
    %p30 = por %p28, %p29
    %p31 = scmp.ne.s32.totalorder %s23, %s26
    %p32 = scmp.eq.s32.totalorder %s13, 0
    %p33 = por %p31, %p32
    %p34 = scmp.ne.s32.totalorder %s23, %s26
    %p35 = scmp.eq.s32.totalorder %s18, 1
    %p36 = por %p34, %p35
    %p37 = scmp.ne.s32.totalorder %s26, %s27
    %p38 = scmp.eq.s32.totalorder %s18, 0
    %p39 = por %p37, %p38
    %p40 = scmp.ne.s32.totalorder %s26, %s27
    %p41 = scmp.eq.s32.totalorder %s19, 1
    %p42 = por %p40, %p41
    %p44 = scmp.ne.s32.totalorder %s27, %s43
    %p45 = scmp.eq.s32.totalorder %s19, 0
    %p46 = por %p44, %p45
    %s48 = sadd.s32 %s47, 1
    %p51 = scmp.eq.s32.totalorder %s13, 1
    %p52 = scmp.ne.s32.totalorder %s47, %s49
    %p53 = scmp.eq.s32.totalorder %s13, 0
    %p54 = por %p52, %p53
    %p55 = scmp.ne.s32.totalorder %s47, %s49
    %p56 = scmp.eq.s32.totalorder %s18, 1
    %p57 = por %p55, %p56
    %p58 = scmp.ne.s32.totalorder %s49, %s50
    %p59 = scmp.eq.s32.totalorder %s18, 0
    %p60 = por %p58, %p59
    %p61 = scmp.ne.s32.totalorder %s49, %s50
    %p62 = scmp.eq.s32.totalorder %s19, 1
    %p63 = por %p61, %p62
    %p65 = scmp.ne.s32.totalorder %s50, %s64
    %p66 = scmp.eq.s32.totalorder %s19, 0
    %p67 = por %p65, %p66
    %s69 = sadd.s32 %s68, 1
    %p72 = scmp.eq.s32.totalorder %s13, 1
    %p73 = scmp.ne.s32.totalorder %s68, %s70
    %p74 = scmp.eq.s32.totalorder %s13, 0
    %p75 = por %p73, %p74
    %p76 = scmp.ne.s32.totalorder %s68, %s70
    %p77 = scmp.eq.s32.totalorder %s18, 1
    %p78 = por %p76, %p77
    %p79 = scmp.ne.s32.totalorder %s70, %s71
    %p80 = scmp.eq.s32.totalorder %s18, 0
    %p81 = por %p79, %p80
    %p82 = scmp.ne.s32.totalorder %s70, %s71
    %p83 = scmp.eq.s32.totalorder %s19, 1
    %p84 = por %p82, %p83
    %p86 = scmp.ne.s32.totalorder %s71, %s85
    %p87 = scmp.eq.s32.totalorder %s19, 0
    %p88 = por %p86, %p87
    %s90 = sadd.s32 %s89, 1
    %p93 = scmp.eq.s32.totalorder %s13, 1
    %p94 = scmp.ne.s32.totalorder %s89, %s91
    %p95 = scmp.eq.s32.totalorder %s13, 0
    %p96 = por %p94, %p95
    %p97 = scmp.ne.s32.totalorder %s89, %s91
    %p98 = scmp.eq.s32.totalorder %s18, 1
    %p99 = por %p97, %p98
    %p100 = scmp.ne.s32.totalorder %s91, %s92
    %p101 = scmp.eq.s32.totalorder %s18, 0
    %p102 = por %p100, %p101
    %p103 = scmp.ne.s32.totalorder %s91, %s92
    %p104 = scmp.eq.s32.totalorder %s19, 1
    %p105 = por %p103, %p104
    %p107 = scmp.ne.s32.totalorder %s92, %s106
    %p108 = scmp.eq.s32.totalorder %s19, 0
    %p109 = por %p107, %p108
    %s111 = sadd.s32 %s110, 1
    %p114 = scmp.eq.s32.totalorder %s13, 1
    %p115 = scmp.ne.s32.totalorder %s110, %s112
    %p116 = scmp.eq.s32.totalorder %s13, 0
    %p117 = por %p115, %p116
    %p118 = scmp.ne.s32.totalorder %s110, %s112
    %p119 = scmp.eq.s32.totalorder %s18, 1
    %p120 = por %p118, %p119
    %p121 = scmp.ne.s32.totalorder %s112, %s113
    %p122 = scmp.eq.s32.totalorder %s18, 0
    %p123 = por %p121, %p122
    %p124 = scmp.ne.s32.totalorder %s112, %s113
    %p125 = scmp.eq.s32.totalorder %s19, 1
    %p126 = por %p124, %p125
    %p128 = scmp.ne.s32.totalorder %s113, %s127
    %p129 = scmp.eq.s32.totalorder %s19, 0
    %p130 = por %p128, %p129
    %s132 = sadd.s32 %s131, 1
    %p135 = scmp.eq.s32.totalorder %s13, 1
    %p136 = scmp.ne.s32.totalorder %s131, %s133
    %p137 = scmp.eq.s32.totalorder %s13, 0
    %p138 = por %p136, %p137
    %p139 = scmp.ne.s32.totalorder %s131, %s133
    %p140 = scmp.eq.s32.totalorder %s18, 1
    %p141 = por %p139, %p140
    %p142 = scmp.ne.s32.totalorder %s133, %s134
    %p143 = scmp.eq.s32.totalorder %s18, 0
    %p144 = por %p142, %p143
    %p145 = scmp.ne.s32.totalorder %s133, %s134
    %p146 = scmp.eq.s32.totalorder %s19, 1
    %p147 = por %p145, %p146
    %p149 = scmp.ne.s32.totalorder %s134, %s148
    %p150 = scmp.eq.s32.totalorder %s19, 0
    %p151 = por %p149, %p150
    %s153 = sadd.s32 %s152, 1
    %p156 = scmp.eq.s32.totalorder %s13, 1
    %p157 = scmp.ne.s32.totalorder %s152, %s154
    %p158 = scmp.eq.s32.totalorder %s13, 0
    %p159 = por %p157, %p158
    %p160 = scmp.ne.s32.totalorder %s152, %s154
    %p161 = scmp.eq.s32.totalorder %s18, 1
    %p162 = por %p160, %p161
    %p163 = scmp.ne.s32.totalorder %s154, %s155
    %p164 = scmp.eq.s32.totalorder %s18, 0
    %p165 = por %p163, %p164
    %p166 = scmp.ne.s32.totalorder %s154, %s155
    %p167 = scmp.eq.s32.totalorder %s19, 1
    %p168 = por %p166, %p167
    %p170 = scmp.ne.s32.totalorder %s155, %s169
    %p171 = scmp.eq.s32.totalorder %s19, 0
    %p172 = por %p170, %p171
    %s173 = ssub.s32 %s13, %s20
    %p174 = scmp.eq.s32.totalorder %s173, 0
    %s176 = sadd.s32 %s175, 1
    %s177 = scalar_select %p174, %s175, %s176
    %p180 = pneg %p174
    %p181 = scmp.eq.s32.totalorder %s13, 1
    %p182 = por %p180, %p181
    %p183 = scmp.ne.s32.totalorder %s175, %s178
    %p184 = scmp.eq.s32.totalorder %s13, 0
    %p185 = por %p183, %p184
    %p186 = scmp.ne.s32.totalorder %s175, %s178
    %p187 = scmp.eq.s32.totalorder %s18, 1
    %p188 = por %p186, %p187
    %p189 = scmp.ne.s32.totalorder %s178, %s179
    %p190 = scmp.eq.s32.totalorder %s18, 0
    %p191 = por %p189, %p190
    %p192 = scmp.ne.s32.totalorder %s178, %s179
    %p193 = scmp.eq.s32.totalorder %s19, 1
    %p194 = por %p192, %p193
    %p196 = scmp.ne.s32.totalorder %s179, %s195
    %p197 = scmp.eq.s32.totalorder %s19, 0
    %p198 = por %p196, %p197
    %p199 = scmp.le.s32.totalorder 1, %s13
    %p200 = scmp.lt.s32.totalorder %s13, 3
    %p201 = pnand %p199, %p200
    %p202 = pneg %p201
    // Predicated region
    $region9: #{tpu_custom_call.1} parent=5 // pred_check
      _
    $region10: #{tpu_custom_call.1} parent=5 // pred_check_branch
      %204 = sbr.rel (%p201) target = $region12
    $region11: #{tpu_custom_call.1} parent=5 // pred_region
      %s205 = ssub.s32 %s13, 1
      // Predicated region
      $region13: #{tpu_custom_call.1} parent=11 // pred_check
        %p206 = pneg %p60
      $region14: #{tpu_custom_call.1} parent=11 // pred_check_branch
        %208 = sbr.rel (%p206) target = $region16
      $region15: #{tpu_custom_call.1} parent=11 // pred_region
        _
      $region16: #{tpu_custom_call.1} parent=11 // pred_fallthru
        _
      // Predicated region
      $region17: #{tpu_custom_call.1} parent=11 // pred_check
        %p209 = pneg %p81
      $region18: #{tpu_custom_call.1} parent=11 // pred_check_branch
        %211 = sbr.rel (%p209) target = $region20
      $region19: #{tpu_custom_call.1} parent=11 // pred_region
        _
      $region20: #{tpu_custom_call.1} parent=11 // pred_fallthru
        _
      // Predicated region
      $region21: #{tpu_custom_call.1} parent=11 // pred_check
        %p212 = pneg %p102
      $region22: #{tpu_custom_call.1} parent=11 // pred_check_branch
        %214 = sbr.rel (%p212) target = $region24
      $region23: #{tpu_custom_call.1} parent=11 // pred_region
        _
      $region24: #{tpu_custom_call.1} parent=11 // pred_fallthru
        _
      // Predicated region
      $region25: #{tpu_custom_call.1} parent=11 // pred_check
        %p215 = pneg %p123
      $region26: #{tpu_custom_call.1} parent=11 // pred_check_branch
        %217 = sbr.rel (%p215) target = $region28
      $region27: #{tpu_custom_call.1} parent=11 // pred_region
        _
      $region28: #{tpu_custom_call.1} parent=11 // pred_fallthru
        _
      // Predicated region
      $region29: #{tpu_custom_call.1} parent=11 // pred_check
        %p218 = pneg %p144
      $region30: #{tpu_custom_call.1} parent=11 // pred_check_branch
        %220 = sbr.rel (%p218) target = $region32
      $region31: #{tpu_custom_call.1} parent=11 // pred_region
        _
      $region32: #{tpu_custom_call.1} parent=11 // pred_fallthru
        _
      // Predicated region
      $region33: #{tpu_custom_call.1} parent=11 // pred_check
        %p221 = pneg %p165
      $region34: #{tpu_custom_call.1} parent=11 // pred_check_branch
        %223 = sbr.rel (%p221) target = $region36
      $region35: #{tpu_custom_call.1} parent=11 // pred_region
        _
      $region36: #{tpu_custom_call.1} parent=11 // pred_fallthru
        _
    $region12: #{tpu_custom_call.1} parent=5 // pred_fallthru
      _
    %p224 = scmp.lt.s32.totalorder %s13, 2
    // Predicated region
    $region37: #{tpu_custom_call.1} parent=5 // pred_check
      %p225 = pneg %p224
    $region38: #{tpu_custom_call.1} parent=5 // pred_check_branch
      %227 = sbr.rel (%p225) target = $region40
    $region39: #{tpu_custom_call.1} parent=5 // pred_region
      // Predicated region
      $region41: #{tpu_custom_call.1} parent=39 // pred_check
        %p228 = pneg %p33
      $region42: #{tpu_custom_call.1} parent=39 // pred_check_branch
        %230 = sbr.rel (%p228) target = $region44
      $region43: #{tpu_custom_call.1} parent=39 // pred_region
        %p231 = scmp.lt.s32.totalorder %s13, 1
        %s232 = scalar_select %p231, %s13, 1
        %s233 = smul.addr %s232, 8
        %s234 = smul.addr %s233, 8
        %s235 = scalar_lea.vmem %s0, %s234
      $region44: #{tpu_custom_call.1} parent=39 // pred_fallthru
        _
    $region40: #{tpu_custom_call.1} parent=5 // pred_fallthru
      _
    %p236 = scmp.le.s32.totalorder 1, %s13
    %p237 = scmp.lt.s32.totalorder %s13, 3
    %p238 = pnand %p236, %p237
    %p239 = pneg %p238
    // Predicated region
    $region45: #{tpu_custom_call.1} parent=5 // pred_check
      _
    $region46: #{tpu_custom_call.1} parent=5 // pred_check_branch
      %241 = sbr.rel (%p238) target = $region48
    $region47: #{tpu_custom_call.1} parent=5 // pred_region
      %s242 = ssub.s32 %s13, 1
      %p243 = scmp.lt.s32.totalorder %s18, 1
      %s244 = scalar_select %p243, %s18, 1
      %s245 = smul.addr %s244, 8
      %s246 = smul.addr %s245, 8
      %s247 = scalar_lea.vmem %s0, %s246
      %p248 = pneg %p39
      %p249 = pneg %p36
      %p250 = pneg %p60
      %p251 = pneg %p57
      %p252 = pneg %p81
      %p253 = pneg %p78
      %p254 = pneg %p102
      %p255 = pneg %p99
      %p256 = pneg %p123
      %p257 = pneg %p120
      %p258 = pneg %p144
      %p259 = pneg %p141
      %p260 = pneg %p165
      %p261 = pneg %p162
      %p262 = pneg %p191
      %p263 = pneg %p188
      %p264 = scmp.lt.s32.totalorder %s18, 1
      %s265 = scalar_select %p264, %s18, 1
      %s266 = smul.addr %s265, 8
      %s267 = smul.addr %s266, 8
      %s268 = scalar_lea.vmem %s7, %s267
      %p269 = scmp.lt.s32.totalorder %s18, 1
      %s270 = scalar_select %p269, %s18, 1
      %s271 = smul.addr %s270, 8
      %s272 = smul.addr %s271, 8
      %s273 = scalar_lea.vmem %s0, %s272
      %p274 = scmp.lt.s32.totalorder %s18, 1
      %s275 = scalar_select %p274, %s18, 1
      %s276 = smul.addr %s275, 8
      %s277 = smul.addr %s276, 8
      %s278 = scalar_lea.vmem %s7, %s277
      %v279 = vld [vmem:[%s273] sm:$0xff]
      %v280 = vld [vmem:[%s273 + $0x8] sm:$0xff]
      %v281 = vld [vmem:[%s273 + $0x10] sm:$0xff]
      %v282 = vld [vmem:[%s273 + $0x18] sm:$0xff]
      %v283 = vld [vmem:[%s273 + $0x20] sm:$0xff]
      %v284 = vld [vmem:[%s273 + $0x28] sm:$0xff]
      %v285 = vld [vmem:[%s273 + $0x30] sm:$0xff]
      %v286 = vld [vmem:[%s273 + $0x38] sm:$0xff]
      %v287 = vld [vmem:[%s1] sm:$0xff]
      %vm288 = vcmask 64512
      %v290 = vsel %vm288, %v279, 0
      %v293 = vsel %vm288, %v280, 0
      %v296 = vsel %vm288, %v281, 0
      %v299 = vsel %vm288, %v282, 0
      %v302 = vsel %vm288, %v283, 0
      %v305 = vsel %vm288, %v284, 0
      %v308 = vsel %vm288, %v285, 0
      %v311 = vsel %vm288, %v286, 0
      %313 = vmatprep.subr.mxu0 0.0
      %314 = vmatpush1.msra.mxu0 0.0
      %315 = vmatprep.subr.mxu0 0.0
      %316 = vmatpush1.msra.mxu0 0.0
      %317 = vmatprep.subr.mxu0 0.0
      %318 = vmatpush1.msra.mxu0 0.0
      %319 = vmatprep.subr.mxu0 0.0
      %320 = vmatpush1.msra.mxu0 0.0
      %321 = vmatprep.subr.mxu0 0.0
      %322 = vmatpush1.msra.mxu0 0.0
      %323 = vmatprep.subr.mxu0 0.0
      %324 = vmatpush1.msra.mxu0 0.0
      %325 = vmatprep.subr.mxu0 0.0
      %326 = vmatpush1.msra.mxu0 0.0
      %327 = vmatprep.subr.mxu0 0.0
      %328 = vmatpush1.msra.mxu0 0.0
      %329 = vmatprep.subr.mxu0 0.0
      %330 = vmatpush1.msra.mxu0 0.0
      %331 = vmatprep.subr.mxu0 0.0
      %332 = vmatpush1.msra.mxu0 0.0
      %333 = vmatprep.subr.mxu0 0.0
      %334 = vmatpush1.msra.mxu0 0.0
      %335 = vmatprep.subr.mxu0 0.0
      %336 = vmatpush1.msra.mxu0 0.0
      %337 = vmatprep.subr.mxu0 0.0
      %338 = vmatpush1.msra.mxu0 0.0
      %339 = vmatprep.subr.mxu0 0.0
      %340 = vmatpush1.msra.mxu0 0.0
      %341 = vmatprep.subr.mxu0 0.0
      %342 = vmatpush1.msra.mxu0 0.0
      %343 = vmatprep.subr.mxu0 0.0
      %344 = vmatpush1.msra.mxu0 %v287
      %345 = vmatprep.subr.mxu0 0.0
      %346 = vmatpush2.msra.mxu0 0.0
      %347 = vmatprep.subr.mxu0 0.0
      %348 = vmatpush2.msra.mxu0 0.0
      %349 = vmatprep.subr.mxu0 0.0
      %350 = vmatpush2.msra.mxu0 0.0
      %351 = vmatprep.subr.mxu0 0.0
      %352 = vmatpush2.msra.mxu0 0.0
      %353 = vmatprep.subr.mxu0 0.0
      %354 = vmatpush2.msra.mxu0 0.0
      %355 = vmatprep.subr.mxu0 0.0
      %356 = vmatpush2.msra.mxu0 0.0
      %357 = vmatprep.subr.mxu0 0.0
      %358 = vmatpush2.msra.mxu0 0.0
      %359 = vmatprep.subr.mxu0 0.0
      %360 = vmatpush2.msra.mxu0 0.0
      %361 = vmatprep.subr.mxu0 0.0
      %362 = vmatpush2.msra.mxu0 0.0
      %363 = vmatprep.subr.mxu0 0.0
      %364 = vmatpush2.msra.mxu0 0.0
      %365 = vmatprep.subr.mxu0 0.0
      %366 = vmatpush2.msra.mxu0 0.0
      %367 = vmatprep.subr.mxu0 0.0
      %368 = vmatpush2.msra.mxu0 0.0
      %369 = vmatprep.subr.mxu0 0.0
      %370 = vmatpush2.msra.mxu0 0.0
      %371 = vmatprep.subr.mxu0 0.0
      %372 = vmatpush2.msra.mxu0 0.0
      %373 = vmatprep.subr.mxu0 0.0
      %374 = vmatpush2.msra.mxu0 0.0
      %375 = vmatprep.subr.mxu0 0.0
      %376 = vmatpush2.msra.mxu0 0.0
      %377 = vmatprep.mubr.f32.mxu0 0.0
      %378 = vmatmul.mubr.f32.gmra.mxu0 %v290
      %v379 = vpop.f32.mrf.mxu0
      %v380 = vadd.f32 0.0, %v379
      %v381 = vpop.f32.mrf.mxu0
      %382 = vmatprep.mubr.f32.mxu0 0.0
      %383 = vmatmul.mubr.f32.gmra.mxu0 %v293
      %v384 = vpop.f32.mrf.mxu0
      %v385 = vadd.f32 0.0, %v384
      %v386 = vpop.f32.mrf.mxu0
      %387 = vmatprep.mubr.f32.mxu0 0.0
      %388 = vmatmul.mubr.f32.gmra.mxu0 %v296
      %v389 = vpop.f32.mrf.mxu0
      %v390 = vadd.f32 0.0, %v389
      %v391 = vpop.f32.mrf.mxu0
      %392 = vmatprep.mubr.f32.mxu0 0.0
      %393 = vmatmul.mubr.f32.gmra.mxu0 %v299
      %v394 = vpop.f32.mrf.mxu0
      %v395 = vadd.f32 0.0, %v394
      %v396 = vpop.f32.mrf.mxu0
      %397 = vmatprep.mubr.f32.mxu0 0.0
      %398 = vmatmul.mubr.f32.gmra.mxu0 %v302
      %v399 = vpop.f32.mrf.mxu0
      %v400 = vadd.f32 0.0, %v399
      %v401 = vpop.f32.mrf.mxu0
      %402 = vmatprep.mubr.f32.mxu0 0.0
      %403 = vmatmul.mubr.f32.gmra.mxu0 %v305
      %v404 = vpop.f32.mrf.mxu0
      %v405 = vadd.f32 0.0, %v404
      %v406 = vpop.f32.mrf.mxu0
      %407 = vmatprep.mubr.f32.mxu0 0.0
      %408 = vmatmul.mubr.f32.gmra.mxu0 %v308
      %v409 = vpop.f32.mrf.mxu0
      %v410 = vadd.f32 0.0, %v409
      %v411 = vpop.f32.mrf.mxu0
      %412 = vmatprep.mubr.f32.mxu0 0.0
      %413 = vmatmul.mubr.f32.gmra.mxu0 %v311
      %v414 = vpop.f32.mrf.mxu0
      %v415 = vadd.f32 0.0, %v414
      %v416 = vpop.f32.mrf.mxu0
      %417 = vdwg.mxu0
      %v418 = vld [vmem:[%s2] sm:$0xff]
      %v420 = vsel %vm288, %v380, 0
      %v423 = vsel %vm288, %v385, 0
      %v426 = vsel %vm288, %v390, 0
      %v429 = vsel %vm288, %v395, 0
      %v432 = vsel %vm288, %v400, 0
      %v435 = vsel %vm288, %v405, 0
      %v438 = vsel %vm288, %v410, 0
      %v441 = vsel %vm288, %v415, 0
      %443 = vmatprep.subr.mxu0 0.0
      %444 = vmatpush1.msra.mxu0 0.0
      %445 = vmatprep.subr.mxu0 0.0
      %446 = vmatpush1.msra.mxu0 0.0
      %447 = vmatprep.subr.mxu0 0.0
      %448 = vmatpush1.msra.mxu0 0.0
      %449 = vmatprep.subr.mxu0 0.0
      %450 = vmatpush1.msra.mxu0 0.0
      %451 = vmatprep.subr.mxu0 0.0
      %452 = vmatpush1.msra.mxu0 0.0
      %453 = vmatprep.subr.mxu0 0.0
      %454 = vmatpush1.msra.mxu0 0.0
      %455 = vmatprep.subr.mxu0 0.0
      %456 = vmatpush1.msra.mxu0 0.0
      %457 = vmatprep.subr.mxu0 0.0
      %458 = vmatpush1.msra.mxu0 0.0
      %459 = vmatprep.subr.mxu0 0.0
      %460 = vmatpush1.msra.mxu0 0.0
      %461 = vmatprep.subr.mxu0 0.0
      %462 = vmatpush1.msra.mxu0 0.0
      %463 = vmatprep.subr.mxu0 0.0
      %464 = vmatpush1.msra.mxu0 0.0
      %465 = vmatprep.subr.mxu0 0.0
      %466 = vmatpush1.msra.mxu0 0.0
      %467 = vmatprep.subr.mxu0 0.0
      %468 = vmatpush1.msra.mxu0 0.0
      %469 = vmatprep.subr.mxu0 0.0
      %470 = vmatpush1.msra.mxu0 0.0
      %471 = vmatprep.subr.mxu0 0.0
      %472 = vmatpush1.msra.mxu0 0.0
      %473 = vmatprep.subr.mxu0 0.0
      %474 = vmatpush1.msra.mxu0 %v418
      %475 = vmatprep.subr.mxu0 0.0
      %476 = vmatpush2.msra.mxu0 0.0
      %477 = vmatprep.subr.mxu0 0.0
      %478 = vmatpush2.msra.mxu0 0.0
      %479 = vmatprep.subr.mxu0 0.0
      %480 = vmatpush2.msra.mxu0 0.0
      %481 = vmatprep.subr.mxu0 0.0
      %482 = vmatpush2.msra.mxu0 0.0
      %483 = vmatprep.subr.mxu0 0.0
      %484 = vmatpush2.msra.mxu0 0.0
      %485 = vmatprep.subr.mxu0 0.0
      %486 = vmatpush2.msra.mxu0 0.0
      %487 = vmatprep.subr.mxu0 0.0
      %488 = vmatpush2.msra.mxu0 0.0
      %489 = vmatprep.subr.mxu0 0.0
      %490 = vmatpush2.msra.mxu0 0.0
      %491 = vmatprep.subr.mxu0 0.0
      %492 = vmatpush2.msra.mxu0 0.0
      %493 = vmatprep.subr.mxu0 0.0
      %494 = vmatpush2.msra.mxu0 0.0
      %495 = vmatprep.subr.mxu0 0.0
      %496 = vmatpush2.msra.mxu0 0.0
      %497 = vmatprep.subr.mxu0 0.0
      %498 = vmatpush2.msra.mxu0 0.0
      %499 = vmatprep.subr.mxu0 0.0
      %500 = vmatpush2.msra.mxu0 0.0
      %501 = vmatprep.subr.mxu0 0.0
      %502 = vmatpush2.msra.mxu0 0.0
      %503 = vmatprep.subr.mxu0 0.0
      %504 = vmatpush2.msra.mxu0 0.0
      %505 = vmatprep.subr.mxu0 0.0
      %506 = vmatpush2.msra.mxu0 0.0
      %507 = vmatprep.mubr.f32.mxu0 0.0
      %508 = vmatmul.mubr.f32.gmra.mxu0 %v420
      %v509 = vpop.f32.mrf.mxu0
      %v510 = vadd.f32 0.0, %v509
      %v511 = vpop.f32.mrf.mxu0
      %512 = vmatprep.mubr.f32.mxu0 0.0
      %513 = vmatmul.mubr.f32.gmra.mxu0 %v423
      %v514 = vpop.f32.mrf.mxu0
      %v515 = vadd.f32 0.0, %v514
      %v516 = vpop.f32.mrf.mxu0
      %517 = vmatprep.mubr.f32.mxu0 0.0
      %518 = vmatmul.mubr.f32.gmra.mxu0 %v426
      %v519 = vpop.f32.mrf.mxu0
      %v520 = vadd.f32 0.0, %v519
      %v521 = vpop.f32.mrf.mxu0
      %522 = vmatprep.mubr.f32.mxu0 0.0
      %523 = vmatmul.mubr.f32.gmra.mxu0 %v429
      %v524 = vpop.f32.mrf.mxu0
      %v525 = vadd.f32 0.0, %v524
      %v526 = vpop.f32.mrf.mxu0
      %527 = vmatprep.mubr.f32.mxu0 0.0
      %528 = vmatmul.mubr.f32.gmra.mxu0 %v432
      %v529 = vpop.f32.mrf.mxu0
      %v530 = vadd.f32 0.0, %v529
      %v531 = vpop.f32.mrf.mxu0
      %532 = vmatprep.mubr.f32.mxu0 0.0
      %533 = vmatmul.mubr.f32.gmra.mxu0 %v435
      %v534 = vpop.f32.mrf.mxu0
      %v535 = vadd.f32 0.0, %v534
      %v536 = vpop.f32.mrf.mxu0
      %537 = vmatprep.mubr.f32.mxu0 0.0
      %538 = vmatmul.mubr.f32.gmra.mxu0 %v438
      %v539 = vpop.f32.mrf.mxu0
      %v540 = vadd.f32 0.0, %v539
      %v541 = vpop.f32.mrf.mxu0
      %542 = vmatprep.mubr.f32.mxu0 0.0
      %543 = vmatmul.mubr.f32.gmra.mxu0 %v441
      %v544 = vpop.f32.mrf.mxu0
      %v545 = vadd.f32 0.0, %v544
      %v546 = vpop.f32.mrf.mxu0
      %547 = vdwg.mxu0
      %vm548 = vcmask 31744
      %v549 = vsel %vm548, %v510, -inf
      %v550 = vsel %vm548, %v515, -inf
      %v551 = vsel %vm548, %v520, -inf
      %v552 = vsel %vm548, %v525, -inf
      %v553 = vsel %vm548, %v530, -inf
      %v554 = vmax.f32 %v549, %v553
      %v555 = vsel %vm548, %v535, -inf
      %v556 = vmax.f32 %v550, %v555
      %v557 = vsel %vm548, %v540, -inf
      %v558 = vmax.f32 %v551, %v557
      %v559 = vsel %vm548, %v545, -inf
      %v560 = vmax.f32 %v552, %v559
      %v561 = vmax.f32 %v554, %v556
      %v562 = vmax.f32 %v558, %v560
      %v563 = vmax.f32 %v561, %v562
      %564 = vmax.xlane.f32.xlu0 %v563
      %v565 = vpop.xlane.xlu0 %564
      %v566 = vrot.slane %v565, 4
      %v567 = vmax.f32 %v565, %v566
      %v568 = vrot.slane %v567, 2
      %v569 = vmax.f32 %v567, %v568
      %v570 = vrot.slane %v569, 1
      %v571 = vmax.f32 %v569, %v570
      %s572 = vtos %v571
      %v573 = vstv %s572
      %v574 = vsub.f32 %v510, %v573
      %v575 = vsub.f32 %v515, %v573
      %v576 = vsub.f32 %v520, %v573
      %v577 = vsub.f32 %v525, %v573
      %v578 = vsub.f32 %v530, %v573
      %v579 = vsub.f32 %v535, %v573
      %v580 = vsub.f32 %v540, %v573
      %v581 = vsub.f32 %v545, %v573
      %v582 = vmul.f32 %v574, 1.442695
      %v583 = vpow.pop %v582
      %v584 = vmul.f32 %v575, 1.442695
      %v585 = vpow.pop %v584
      %v586 = vmul.f32 %v576, 1.442695
      %v587 = vpow.pop %v586
      %v588 = vmul.f32 %v577, 1.442695
      %v589 = vpow.pop %v588
      %v590 = vmul.f32 %v578, 1.442695
      %v591 = vpow.pop %v590
      %v592 = vmul.f32 %v579, 1.442695
      %v593 = vpow.pop %v592
      %v594 = vmul.f32 %v580, 1.442695
      %v595 = vpow.pop %v594
      %v596 = vmul.f32 %v581, 1.442695
      %v597 = vpow.pop %v596
      %598 = vst.msk [vmem:[#allocation2] sm:$0xff] %vm548, 0.0
      %vm599 = vcmask 25600
      %600 = vst.msk [vmem:[#allocation2 + $0x8] sm:$0x3] %vm599, 0.0
      %s601 = scalar_lea.vmem [#allocation2], 144
      %602 = vst.msk [vmem:[%s601] sm:$0xff] %vm548, 0.0
      %603 = vst.msk [vmem:[%s601 + $0x8] sm:$0x3] %vm599, 0.0
      %s604 = scalar_lea.vmem [#allocation2], 16
      %vm605 = vcmask 24576
      %606 = vst.msk [vmem:[%s604] sm:$0x1] %vm605, 0.0
      %607 = vst.msk [vmem:[%s604 + $0x10] sm:$0x1] %vm605, 0.0
      %608 = vst.msk [vmem:[%s604 + $0x20] sm:$0x1] %vm605, 0.0
      %609 = vst.msk [vmem:[%s604 + $0x30] sm:$0x1] %vm605, 0.0
      %610 = vst.msk [vmem:[%s604 + $0x40] sm:$0x1] %vm605, 0.0
      %611 = vst.msk [vmem:[%s604 + $0x50] sm:$0x1] %vm605, 0.0
      %612 = vst.msk [vmem:[%s604 + $0x60] sm:$0x1] %vm605, 0.0
      %613 = vst.msk [vmem:[%s604 + $0x70] sm:$0x1] %vm605, 0.0
      %614 = vst.msk [vmem:[%s604 + $0x9] sm:$0x1] %vm605, 0.0
      %615 = vst.msk [vmem:[%s604 + $0x19] sm:$0x1] %vm605, 0.0
      %616 = vst.msk [vmem:[%s604 + $0x29] sm:$0x1] %vm605, 0.0
      %617 = vst.msk [vmem:[%s604 + $0x39] sm:$0x1] %vm605, 0.0
      %618 = vst.msk [vmem:[%s604 + $0x49] sm:$0x1] %vm605, 0.0
      %619 = vst.msk [vmem:[%s604 + $0x59] sm:$0x1] %vm605, 0.0
      %620 = vst.msk [vmem:[%s604 + $0x69] sm:$0x1] %vm605, 0.0
      %621 = vst.msk [vmem:[%s604 + $0x79] sm:$0x1] %vm605, 0.0
      %622 = vst.msk [vmem:[#allocation3] sm:$0xff] %vm288, 0.0
      %vm623 = vcmask 58368
      %624 = vst.msk [vmem:[#allocation3 + $0x8] sm:$0x3] %vm623, 0.0
      %s625 = scalar_lea.vmem [#allocation3], 144
      %626 = vst.msk [vmem:[%s625] sm:$0xff] %vm288, 0.0
      %627 = vst.msk [vmem:[%s625 + $0x8] sm:$0x3] %vm623, 0.0
      %s628 = scalar_lea.vmem [#allocation3], 16
      %vm629 = vcmask 57344
      %630 = vst.msk [vmem:[%s628] sm:$0x1] %vm629, 0.0
      %631 = vst.msk [vmem:[%s628 + $0x10] sm:$0x1] %vm629, 0.0
      %632 = vst.msk [vmem:[%s628 + $0x20] sm:$0x1] %vm629, 0.0
      %633 = vst.msk [vmem:[%s628 + $0x30] sm:$0x1] %vm629, 0.0
      %634 = vst.msk [vmem:[%s628 + $0x40] sm:$0x1] %vm629, 0.0
      %635 = vst.msk [vmem:[%s628 + $0x50] sm:$0x1] %vm629, 0.0
      %636 = vst.msk [vmem:[%s628 + $0x60] sm:$0x1] %vm629, 0.0
      %637 = vst.msk [vmem:[%s628 + $0x70] sm:$0x1] %vm629, 0.0
      %638 = vst.msk [vmem:[%s628 + $0x9] sm:$0x1] %vm629, 0.0
      %639 = vst.msk [vmem:[%s628 + $0x19] sm:$0x1] %vm629, 0.0
      %640 = vst.msk [vmem:[%s628 + $0x29] sm:$0x1] %vm629, 0.0
      %641 = vst.msk [vmem:[%s628 + $0x39] sm:$0x1] %vm629, 0.0
      %642 = vst.msk [vmem:[%s628 + $0x49] sm:$0x1] %vm629, 0.0
      %643 = vst.msk [vmem:[%s628 + $0x59] sm:$0x1] %vm629, 0.0
      %644 = vst.msk [vmem:[%s628 + $0x69] sm:$0x1] %vm629, 0.0
      %645 = vst.msk [vmem:[%s628 + $0x79] sm:$0x1] %vm629, 0.0
      %646 = vst.msk [vmem:[%s604 + $0x1] sm:$0xff] %vm548, %v583
      %647 = vst.msk [vmem:[%s604 + $0x11] sm:$0xff] %vm548, %v585
      %648 = vst.msk [vmem:[%s604 + $0x21] sm:$0xff] %vm548, %v587
      %649 = vst.msk [vmem:[%s604 + $0x31] sm:$0xff] %vm548, %v589
      %650 = vst.msk [vmem:[%s604 + $0x41] sm:$0xff] %vm548, %v591
      %651 = vst.msk [vmem:[%s604 + $0x51] sm:$0xff] %vm548, %v593
      %652 = vst.msk [vmem:[%s604 + $0x61] sm:$0xff] %vm548, %v595
      %653 = vst.msk [vmem:[%s604 + $0x71] sm:$0xff] %vm548, %v597
      %v654 = vld [vmem:[#allocation2] sm:$0xff]
      %v655 = vld [vmem:[#allocation2 + $0x10] sm:$0xff]
      %v656 = vld [vmem:[#allocation2 + $0x20] sm:$0xff]
      %v657 = vld [vmem:[#allocation2 + $0x30] sm:$0xff]
      %v658 = vld [vmem:[#allocation2 + $0x40] sm:$0xff]
      %v659 = vld [vmem:[#allocation2 + $0x50] sm:$0xff]
      %v660 = vld [vmem:[#allocation2 + $0x60] sm:$0xff]
      %v661 = vld [vmem:[#allocation2 + $0x70] sm:$0xff]
      %v662 = vld [vmem:[%s5] sm:$0x1]
      %v663 = vlaneseq
      %v664 = vshrl.u32 %v663, 7
      %v665 = vsub.s32 0, %v664
      %v666 = vrot.slane %v662, %v665
      %v667 = vmul.f32 %v654, %v666
      %v668 = vmul.f32 %v655, %v666
      %v669 = vmul.f32 %v656, %v666
      %v670 = vmul.f32 %v657, %v666
      %v671 = vmul.f32 %v658, %v666
      %v672 = vmul.f32 %v659, %v666
      %v673 = vmul.f32 %v660, %v666
      %v674 = vmul.f32 %v661, %v666
      %v675 = vadd.f32 %v667, 0.0
      %v676 = vadd.f32 %v668, 0.0
      %v677 = vadd.f32 %v669, 0.0
      %v678 = vadd.f32 %v670, 0.0
      %v679 = vadd.f32 %v671, 0.0
      %v680 = vadd.f32 %v672, 0.0
      %v681 = vadd.f32 %v673, 0.0
      %v682 = vadd.f32 %v674, 0.0
      %v683 = vld [vmem:[#allocation2 + $0x1] sm:$0xff]
      %v684 = vld [vmem:[#allocation2 + $0x11] sm:$0xff]
      %v685 = vld [vmem:[#allocation2 + $0x21] sm:$0xff]
      %v686 = vld [vmem:[#allocation2 + $0x31] sm:$0xff]
      %v687 = vld [vmem:[#allocation2 + $0x41] sm:$0xff]
      %v688 = vld [vmem:[#allocation2 + $0x51] sm:$0xff]
      %v689 = vld [vmem:[#allocation2 + $0x61] sm:$0xff]
      %v690 = vld [vmem:[#allocation2 + $0x71] sm:$0xff]
      %v691 = vld [vmem:[%s5 + $0x1] sm:$0x1]
      %v692 = vlaneseq
      %v693 = vshrl.u32 %v692, 7
      %v694 = vsub.s32 0, %v693
      %v695 = vrot.slane %v691, %v694
      %v696 = vmul.f32 %v683, %v695
      %v697 = vmul.f32 %v684, %v695
      %v698 = vmul.f32 %v685, %v695
      %v699 = vmul.f32 %v686, %v695
      %v700 = vmul.f32 %v687, %v695
      %v701 = vmul.f32 %v688, %v695
      %v702 = vmul.f32 %v689, %v695
      %v703 = vmul.f32 %v690, %v695
      %v704 = vadd.f32 %v675, %v696
      %v705 = vadd.f32 %v676, %v697
      %v706 = vadd.f32 %v677, %v698
      %v707 = vadd.f32 %v678, %v699
      %v708 = vadd.f32 %v679, %v700
      %v709 = vadd.f32 %v680, %v701
      %v710 = vadd.f32 %v681, %v702
      %v711 = vadd.f32 %v682, %v703
      %v712 = vld [vmem:[#allocation2 + $0x2] sm:$0xff]
      %v713 = vld [vmem:[#allocation2 + $0x12] sm:$0xff]
      %v714 = vld [vmem:[#allocation2 + $0x22] sm:$0xff]
      %v715 = vld [vmem:[#allocation2 + $0x32] sm:$0xff]
      %v716 = vld [vmem:[#allocation2 + $0x42] sm:$0xff]
      %v717 = vld [vmem:[#allocation2 + $0x52] sm:$0xff]
      %v718 = vld [vmem:[#allocation2 + $0x62] sm:$0xff]
      %v719 = vld [vmem:[#allocation2 + $0x72] sm:$0xff]
      %v720 = vld [vmem:[%s5 + $0x2] sm:$0x1]
      %v721 = vlaneseq
      %v722 = vshrl.u32 %v721, 7
      %v723 = vsub.s32 0, %v722
      %v724 = vrot.slane %v720, %v723
      %v725 = vmul.f32 %v712, %v724
      %v726 = vmul.f32 %v713, %v724
      %v727 = vmul.f32 %v714, %v724
      %v728 = vmul.f32 %v715, %v724
      %v729 = vmul.f32 %v716, %v724
      %v730 = vmul.f32 %v717, %v724
      %v731 = vmul.f32 %v718, %v724
      %v732 = vmul.f32 %v719, %v724
      %v733 = vadd.f32 %v704, %v725
      %v734 = vadd.f32 %v705, %v726
      %v735 = vadd.f32 %v706, %v727
      %v736 = vadd.f32 %v707, %v728
      %v737 = vadd.f32 %v708, %v729
      %v738 = vadd.f32 %v709, %v730
      %v739 = vadd.f32 %v710, %v731
      %v740 = vadd.f32 %v711, %v732
      %v741 = vld [vmem:[%s604] sm:$0xff]
      %v742 = vld [vmem:[%s604 + $0x10] sm:$0xff]
      %v743 = vld [vmem:[%s604 + $0x20] sm:$0xff]
      %v744 = vld [vmem:[%s604 + $0x30] sm:$0xff]
      %v745 = vld [vmem:[%s604 + $0x40] sm:$0xff]
      %v746 = vld [vmem:[%s604 + $0x50] sm:$0xff]
      %v747 = vld [vmem:[%s604 + $0x60] sm:$0xff]
      %v748 = vld [vmem:[%s604 + $0x70] sm:$0xff]
      %v749 = vld [vmem:[%s5 + $0x3] sm:$0x1]
      %v750 = vlaneseq
      %v751 = vshrl.u32 %v750, 7
      %v752 = vsub.s32 0, %v751
      %v753 = vrot.slane %v749, %v752
      %v754 = vmul.f32 %v741, %v753
      %v755 = vmul.f32 %v742, %v753
      %v756 = vmul.f32 %v743, %v753
      %v757 = vmul.f32 %v744, %v753
      %v758 = vmul.f32 %v745, %v753
      %v759 = vmul.f32 %v746, %v753
      %v760 = vmul.f32 %v747, %v753
      %v761 = vmul.f32 %v748, %v753
      %v762 = vadd.f32 %v733, %v754
      %v763 = vadd.f32 %v734, %v755
      %v764 = vadd.f32 %v735, %v756
      %v765 = vadd.f32 %v736, %v757
      %v766 = vadd.f32 %v737, %v758
      %v767 = vadd.f32 %v738, %v759
      %v768 = vadd.f32 %v739, %v760
      %v769 = vadd.f32 %v740, %v761
      %v770 = vld [vmem:[%s604 + $0x1] sm:$0xff]
      %v771 = vld [vmem:[%s604 + $0x11] sm:$0xff]
      %v772 = vld [vmem:[%s604 + $0x21] sm:$0xff]
      %v773 = vld [vmem:[%s604 + $0x31] sm:$0xff]
      %v774 = vld [vmem:[%s604 + $0x41] sm:$0xff]
      %v775 = vld [vmem:[%s604 + $0x51] sm:$0xff]
      %v776 = vld [vmem:[%s604 + $0x61] sm:$0xff]
      %v777 = vld [vmem:[%s604 + $0x71] sm:$0xff]
      %v778 = vld [vmem:[%s5 + $0x4] sm:$0x1]
      %v779 = vlaneseq
      %v780 = vshrl.u32 %v779, 7
      %v781 = vsub.s32 0, %v780
      %v782 = vrot.slane %v778, %v781
      %v783 = vmul.f32 %v770, %v782
      %v784 = vmul.f32 %v771, %v782
      %v785 = vmul.f32 %v772, %v782
      %v786 = vmul.f32 %v773, %v782
      %v787 = vmul.f32 %v774, %v782
      %v788 = vmul.f32 %v775, %v782
      %v789 = vmul.f32 %v776, %v782
      %v790 = vmul.f32 %v777, %v782
      %v791 = vadd.f32 %v762, %v783
      %v792 = vadd.f32 %v763, %v784
      %v793 = vadd.f32 %v764, %v785
      %v794 = vadd.f32 %v765, %v786
      %v795 = vadd.f32 %v766, %v787
      %v796 = vadd.f32 %v767, %v788
      %v797 = vadd.f32 %v768, %v789
      %v798 = vadd.f32 %v769, %v790
      %v799 = vld [vmem:[%s604 + $0x2] sm:$0xff]
      %v800 = vld [vmem:[%s604 + $0x12] sm:$0xff]
      %v801 = vld [vmem:[%s604 + $0x22] sm:$0xff]
      %v802 = vld [vmem:[%s604 + $0x32] sm:$0xff]
      %v803 = vld [vmem:[%s604 + $0x42] sm:$0xff]
      %v804 = vld [vmem:[%s604 + $0x52] sm:$0xff]
      %v805 = vld [vmem:[%s604 + $0x62] sm:$0xff]
      %v806 = vld [vmem:[%s604 + $0x72] sm:$0xff]
      %v807 = vld [vmem:[%s5 + $0x5] sm:$0x1]
      %v808 = vlaneseq
      %v809 = vshrl.u32 %v808, 7
      %v810 = vsub.s32 0, %v809
      %v811 = vrot.slane %v807, %v810
      %v812 = vmul.f32 %v799, %v811
      %v813 = vmul.f32 %v800, %v811
      %v814 = vmul.f32 %v801, %v811
      %v815 = vmul.f32 %v802, %v811
      %v816 = vmul.f32 %v803, %v811
      %v817 = vmul.f32 %v804, %v811
      %v818 = vmul.f32 %v805, %v811
      %v819 = vmul.f32 %v806, %v811
      %v820 = vadd.f32 %v791, %v812
      %v821 = vadd.f32 %v792, %v813
      %v822 = vadd.f32 %v793, %v814
      %v823 = vadd.f32 %v794, %v815
      %v824 = vadd.f32 %v795, %v816
      %v825 = vadd.f32 %v796, %v817
      %v826 = vadd.f32 %v797, %v818
      %v827 = vadd.f32 %v798, %v819
      %s828 = scalar_lea.vmem [#allocation2], 32
      %v829 = vld [vmem:[%s828] sm:$0xff]
      %v830 = vld [vmem:[%s828 + $0x10] sm:$0xff]
      %v831 = vld [vmem:[%s828 + $0x20] sm:$0xff]
      %v832 = vld [vmem:[%s828 + $0x30] sm:$0xff]
      %v833 = vld [vmem:[%s828 + $0x40] sm:$0xff]
      %v834 = vld [vmem:[%s828 + $0x50] sm:$0xff]
      %v835 = vld [vmem:[%s828 + $0x60] sm:$0xff]
      %v836 = vld [vmem:[%s828 + $0x70] sm:$0xff]
      %v837 = vld [vmem:[%s5 + $0x6] sm:$0x1]
      %v838 = vlaneseq
      %v839 = vshrl.u32 %v838, 7
      %v840 = vsub.s32 0, %v839
      %v841 = vrot.slane %v837, %v840
      %v842 = vmul.f32 %v829, %v841
      %v843 = vmul.f32 %v830, %v841
      %v844 = vmul.f32 %v831, %v841
      %v845 = vmul.f32 %v832, %v841
      %v846 = vmul.f32 %v833, %v841
      %v847 = vmul.f32 %v834, %v841
      %v848 = vmul.f32 %v835, %v841
      %v849 = vmul.f32 %v836, %v841
      %v850 = vadd.f32 %v820, %v842
      %v851 = vadd.f32 %v821, %v843
      %v852 = vadd.f32 %v822, %v844
      %v853 = vadd.f32 %v823, %v845
      %v854 = vadd.f32 %v824, %v846
      %v855 = vadd.f32 %v825, %v847
      %v856 = vadd.f32 %v826, %v848
      %v857 = vadd.f32 %v827, %v849
      %v858 = vld [vmem:[%s828 + $0x1] sm:$0xff]
      %v859 = vld [vmem:[%s828 + $0x11] sm:$0xff]
      %v860 = vld [vmem:[%s828 + $0x21] sm:$0xff]
      %v861 = vld [vmem:[%s828 + $0x31] sm:$0xff]
      %v862 = vld [vmem:[%s828 + $0x41] sm:$0xff]
      %v863 = vld [vmem:[%s828 + $0x51] sm:$0xff]
      %v864 = vld [vmem:[%s828 + $0x61] sm:$0xff]
      %v865 = vld [vmem:[%s828 + $0x71] sm:$0xff]
      %v866 = vld [vmem:[%s5 + $0x7] sm:$0x1]
      %v867 = vlaneseq
      %v868 = vshrl.u32 %v867, 7
      %v869 = vsub.s32 0, %v868
      %v870 = vrot.slane %v866, %v869
      %v871 = vmul.f32 %v858, %v870
      %v872 = vmul.f32 %v859, %v870
      %v873 = vmul.f32 %v860, %v870
      %v874 = vmul.f32 %v861, %v870
      %v875 = vmul.f32 %v862, %v870
      %v876 = vmul.f32 %v863, %v870
      %v877 = vmul.f32 %v864, %v870
      %v878 = vmul.f32 %v865, %v870
      %v879 = vadd.f32 %v850, %v871
      %v880 = vadd.f32 %v851, %v872
      %v881 = vadd.f32 %v852, %v873
      %v882 = vadd.f32 %v853, %v874
      %v883 = vadd.f32 %v854, %v875
      %v884 = vadd.f32 %v855, %v876
      %v885 = vadd.f32 %v856, %v877
      %v886 = vadd.f32 %v857, %v878
      %v887 = vld [vmem:[%s828 + $0x2] sm:$0xff]
      %v888 = vld [vmem:[%s828 + $0x12] sm:$0xff]
      %v889 = vld [vmem:[%s828 + $0x22] sm:$0xff]
      %v890 = vld [vmem:[%s828 + $0x32] sm:$0xff]
      %v891 = vld [vmem:[%s828 + $0x42] sm:$0xff]
      %v892 = vld [vmem:[%s828 + $0x52] sm:$0xff]
      %v893 = vld [vmem:[%s828 + $0x62] sm:$0xff]
      %v894 = vld [vmem:[%s828 + $0x72] sm:$0xff]
      %v895 = vld [vmem:[%s5 + $0x8] sm:$0x1]
      %v896 = vlaneseq
      %v897 = vshrl.u32 %v896, 7
      %v898 = vsub.s32 0, %v897
      %v899 = vrot.slane %v895, %v898
      %v900 = vmul.f32 %v887, %v899
      %v901 = vmul.f32 %v888, %v899
      %v902 = vmul.f32 %v889, %v899
      %v903 = vmul.f32 %v890, %v899
      %v904 = vmul.f32 %v891, %v899
      %v905 = vmul.f32 %v892, %v899
      %v906 = vmul.f32 %v893, %v899
      %v907 = vmul.f32 %v894, %v899
      %v908 = vadd.f32 %v879, %v900
      %v909 = vadd.f32 %v880, %v901
      %v910 = vadd.f32 %v881, %v902
      %v911 = vadd.f32 %v882, %v903
      %v912 = vadd.f32 %v883, %v904
      %v913 = vadd.f32 %v884, %v905
      %v914 = vadd.f32 %v885, %v906
      %v915 = vadd.f32 %v886, %v907
      %v916 = vrcp.pop %v908
      %v917 = vrcp.pop %v909
      %v918 = vrcp.pop %v910
      %v919 = vrcp.pop %v911
      %v920 = vrcp.pop %v912
      %v921 = vrcp.pop %v913
      %v922 = vrcp.pop %v914
      %v923 = vrcp.pop %v915
      %v924 = vld [vmem:[%s3] sm:$0x3]
      %vm925 = vcmask 15360
      %v927 = vsel %vm925, %v583, 0
      %v930 = vsel %vm925, %v585, 0
      %v933 = vsel %vm925, %v587, 0
      %v936 = vsel %vm925, %v589, 0
      %v939 = vsel %vm925, %v591, 0
      %v942 = vsel %vm925, %v593, 0
      %v945 = vsel %vm925, %v595, 0
      %v948 = vsel %vm925, %v597, 0
      %vm950 = vcmask 1041408
      %v952 = vsel %vm950, %v924, 0
      %954 = vmatprep.subr.mxu0 0.0
      %955 = vmatpush1.msra.mxu0 0.0
      %956 = vmatprep.subr.mxu0 0.0
      %957 = vmatpush1.msra.mxu0 0.0
      %958 = vmatprep.subr.mxu0 0.0
      %959 = vmatpush1.msra.mxu0 0.0
      %960 = vmatprep.subr.mxu0 0.0
      %961 = vmatpush1.msra.mxu0 0.0
      %962 = vmatprep.subr.mxu0 0.0
      %963 = vmatpush1.msra.mxu0 0.0
      %964 = vmatprep.subr.mxu0 0.0
      %965 = vmatpush1.msra.mxu0 0.0
      %966 = vmatprep.subr.mxu0 0.0
      %967 = vmatpush1.msra.mxu0 0.0
      %968 = vmatprep.subr.mxu0 0.0
      %969 = vmatpush1.msra.mxu0 0.0
      %970 = vmatprep.subr.mxu0 0.0
      %971 = vmatpush1.msra.mxu0 0.0
      %972 = vmatprep.subr.mxu0 0.0
      %973 = vmatpush1.msra.mxu0 0.0
      %974 = vmatprep.subr.mxu0 0.0
      %975 = vmatpush1.msra.mxu0 0.0
      %976 = vmatprep.subr.mxu0 0.0
      %977 = vmatpush1.msra.mxu0 0.0
      %978 = vmatprep.subr.mxu0 0.0
      %979 = vmatpush1.msra.mxu0 0.0
      %980 = vmatprep.subr.mxu0 0.0
      %981 = vmatpush1.msra.mxu0 0.0
      %982 = vmatprep.subr.mxu0 0.0
      %983 = vmatpush1.msra.mxu0 0.0
      %984 = vmatprep.subr.mxu0 0.0
      %985 = vmatpush1.msra.mxu0 %v952
      %986 = vmatprep.subr.mxu0 0.0
      %987 = vmatpush2.msra.mxu0 0.0
      %988 = vmatprep.subr.mxu0 0.0
      %989 = vmatpush2.msra.mxu0 0.0
      %990 = vmatprep.subr.mxu0 0.0
      %991 = vmatpush2.msra.mxu0 0.0
      %992 = vmatprep.subr.mxu0 0.0
      %993 = vmatpush2.msra.mxu0 0.0
      %994 = vmatprep.subr.mxu0 0.0
      %995 = vmatpush2.msra.mxu0 0.0
      %996 = vmatprep.subr.mxu0 0.0
      %997 = vmatpush2.msra.mxu0 0.0
      %998 = vmatprep.subr.mxu0 0.0
      %999 = vmatpush2.msra.mxu0 0.0
      %1000 = vmatprep.subr.mxu0 0.0
      %1001 = vmatpush2.msra.mxu0 0.0
      %1002 = vmatprep.subr.mxu0 0.0
      %1003 = vmatpush2.msra.mxu0 0.0
      %1004 = vmatprep.subr.mxu0 0.0
      %1005 = vmatpush2.msra.mxu0 0.0
      %1006 = vmatprep.subr.mxu0 0.0
      %1007 = vmatpush2.msra.mxu0 0.0
      %1008 = vmatprep.subr.mxu0 0.0
      %1009 = vmatpush2.msra.mxu0 0.0
      %1010 = vmatprep.subr.mxu0 0.0
      %1011 = vmatpush2.msra.mxu0 0.0
      %1012 = vmatprep.subr.mxu0 0.0
      %1013 = vmatpush2.msra.mxu0 0.0
      %1014 = vmatprep.subr.mxu0 0.0
      %1015 = vmatpush2.msra.mxu0 0.0
      %1016 = vmatprep.subr.mxu0 0.0
      %1017 = vmatpush2.msra.mxu0 0.0
      %1018 = vmatprep.mubr.f32.mxu0 0.0
      %1019 = vmatmul.mubr.f32.gmra.mxu0 %v927
      %v1020 = vpop.f32.mrf.mxu0
      %v1021 = vadd.f32 0.0, %v1020
      %v1022 = vpop.f32.mrf.mxu0
      %1023 = vmatprep.mubr.f32.mxu0 0.0
      %1024 = vmatmul.mubr.f32.gmra.mxu0 %v930
      %v1025 = vpop.f32.mrf.mxu0
      %v1026 = vadd.f32 0.0, %v1025
      %v1027 = vpop.f32.mrf.mxu0
      %1028 = vmatprep.mubr.f32.mxu0 0.0
      %1029 = vmatmul.mubr.f32.gmra.mxu0 %v933
      %v1030 = vpop.f32.mrf.mxu0
      %v1031 = vadd.f32 0.0, %v1030
      %v1032 = vpop.f32.mrf.mxu0
      %1033 = vmatprep.mubr.f32.mxu0 0.0
      %1034 = vmatmul.mubr.f32.gmra.mxu0 %v936
      %v1035 = vpop.f32.mrf.mxu0
      %v1036 = vadd.f32 0.0, %v1035
      %v1037 = vpop.f32.mrf.mxu0
      %1038 = vmatprep.mubr.f32.mxu0 0.0
      %1039 = vmatmul.mubr.f32.gmra.mxu0 %v939
      %v1040 = vpop.f32.mrf.mxu0
      %v1041 = vadd.f32 0.0, %v1040
      %v1042 = vpop.f32.mrf.mxu0
      %1043 = vmatprep.mubr.f32.mxu0 0.0
      %1044 = vmatmul.mubr.f32.gmra.mxu0 %v942
      %v1045 = vpop.f32.mrf.mxu0
      %v1046 = vadd.f32 0.0, %v1045
      %v1047 = vpop.f32.mrf.mxu0
      %1048 = vmatprep.mubr.f32.mxu0 0.0
      %1049 = vmatmul.mubr.f32.gmra.mxu0 %v945
      %v1050 = vpop.f32.mrf.mxu0
      %v1051 = vadd.f32 0.0, %v1050
      %v1052 = vpop.f32.mrf.mxu0
      %1053 = vmatprep.mubr.f32.mxu0 0.0
      %1054 = vmatmul.mubr.f32.gmra.mxu0 %v948
      %v1055 = vpop.f32.mrf.mxu0
      %v1056 = vadd.f32 0.0, %v1055
      %v1057 = vpop.f32.mrf.mxu0
      %1058 = vdwg.mxu0
      %1059 = vrot.lane.b32.xlu0 %v380, 120
      %v1060 = vpop.permute.xlu0 %1059
      %1061 = vrot.lane.b32.xlu0 %v385, 120
      %v1062 = vpop.permute.xlu0 %1061
      %1063 = vrot.lane.b32.xlu0 %v390, 120
      %v1064 = vpop.permute.xlu0 %1063
      %1065 = vrot.lane.b32.xlu0 %v395, 120
      %v1066 = vpop.permute.xlu0 %1065
      %1067 = vrot.lane.b32.xlu0 %v400, 120
      %v1068 = vpop.permute.xlu0 %1067
      %1069 = vrot.lane.b32.xlu0 %v405, 120
      %v1070 = vpop.permute.xlu0 %1069
      %1071 = vrot.lane.b32.xlu0 %v410, 120
      %v1072 = vpop.permute.xlu0 %1071
      %1073 = vrot.lane.b32.xlu0 %v415, 120
      %v1074 = vpop.permute.xlu0 %1073
      %v1083 = vmul.f32 %v1021, %v1060
      %v1084 = vmul.f32 %v1026, %v1062
      %v1085 = vmul.f32 %v1031, %v1064
      %v1086 = vmul.f32 %v1036, %v1066
      %v1087 = vmul.f32 %v1041, %v1068
      %v1088 = vmul.f32 %v1046, %v1070
      %v1089 = vmul.f32 %v1051, %v1072
      %v1090 = vmul.f32 %v1056, %v1074
      %1091 = vst.msk [vmem:[%s628 + $0x1] sm:$0xff] %vm288, %v1083
      %1092 = vst.msk [vmem:[%s628 + $0x11] sm:$0xff] %vm288, %v1084
      %1093 = vst.msk [vmem:[%s628 + $0x21] sm:$0xff] %vm288, %v1085
      %1094 = vst.msk [vmem:[%s628 + $0x31] sm:$0xff] %vm288, %v1086
      %1095 = vst.msk [vmem:[%s628 + $0x41] sm:$0xff] %vm288, %v1087
      %1096 = vst.msk [vmem:[%s628 + $0x51] sm:$0xff] %vm288, %v1088
      %1097 = vst.msk [vmem:[%s628 + $0x61] sm:$0xff] %vm288, %v1089
      %1098 = vst.msk [vmem:[%s628 + $0x71] sm:$0xff] %vm288, %v1090
      %v1099 = vld [vmem:[#allocation3] sm:$0xff]
      %v1100 = vld [vmem:[#allocation3 + $0x10] sm:$0xff]
      %v1101 = vld [vmem:[#allocation3 + $0x20] sm:$0xff]
      %v1102 = vld [vmem:[#allocation3 + $0x30] sm:$0xff]
      %v1103 = vld [vmem:[#allocation3 + $0x40] sm:$0xff]
      %v1104 = vld [vmem:[#allocation3 + $0x50] sm:$0xff]
      %v1105 = vld [vmem:[#allocation3 + $0x60] sm:$0xff]
      %v1106 = vld [vmem:[#allocation3 + $0x70] sm:$0xff]
      %v1107 = vld [vmem:[%s4] sm:$0x1]
      %v1108 = vlaneseq
      %v1109 = vshrl.u32 %v1108, 7
      %v1110 = vsub.s32 0, %v1109
      %v1111 = vrot.slane %v1107, %v1110
      %v1112 = vmul.f32 %v1099, %v1111
      %v1113 = vmul.f32 %v1100, %v1111
      %v1114 = vmul.f32 %v1101, %v1111
      %v1115 = vmul.f32 %v1102, %v1111
      %v1116 = vmul.f32 %v1103, %v1111
      %v1117 = vmul.f32 %v1104, %v1111
      %v1118 = vmul.f32 %v1105, %v1111
      %v1119 = vmul.f32 %v1106, %v1111
      %v1120 = vadd.f32 %v1112, 0.0
      %v1121 = vadd.f32 %v1113, 0.0
      %v1122 = vadd.f32 %v1114, 0.0
      %v1123 = vadd.f32 %v1115, 0.0
      %v1124 = vadd.f32 %v1116, 0.0
      %v1125 = vadd.f32 %v1117, 0.0
      %v1126 = vadd.f32 %v1118, 0.0
      %v1127 = vadd.f32 %v1119, 0.0
      %v1128 = vld [vmem:[#allocation3 + $0x1] sm:$0xff]
      %v1129 = vld [vmem:[#allocation3 + $0x11] sm:$0xff]
      %v1130 = vld [vmem:[#allocation3 + $0x21] sm:$0xff]
      %v1131 = vld [vmem:[#allocation3 + $0x31] sm:$0xff]
      %v1132 = vld [vmem:[#allocation3 + $0x41] sm:$0xff]
      %v1133 = vld [vmem:[#allocation3 + $0x51] sm:$0xff]
      %v1134 = vld [vmem:[#allocation3 + $0x61] sm:$0xff]
      %v1135 = vld [vmem:[#allocation3 + $0x71] sm:$0xff]
      %v1136 = vld [vmem:[%s4 + $0x1] sm:$0x1]
      %v1137 = vlaneseq
      %v1138 = vshrl.u32 %v1137, 7
      %v1139 = vsub.s32 0, %v1138
      %v1140 = vrot.slane %v1136, %v1139
      %v1141 = vmul.f32 %v1128, %v1140
      %v1142 = vmul.f32 %v1129, %v1140
      %v1143 = vmul.f32 %v1130, %v1140
      %v1144 = vmul.f32 %v1131, %v1140
      %v1145 = vmul.f32 %v1132, %v1140
      %v1146 = vmul.f32 %v1133, %v1140
      %v1147 = vmul.f32 %v1134, %v1140
      %v1148 = vmul.f32 %v1135, %v1140
      %v1149 = vadd.f32 %v1120, %v1141
      %v1150 = vadd.f32 %v1121, %v1142
      %v1151 = vadd.f32 %v1122, %v1143
      %v1152 = vadd.f32 %v1123, %v1144
      %v1153 = vadd.f32 %v1124, %v1145
      %v1154 = vadd.f32 %v1125, %v1146
      %v1155 = vadd.f32 %v1126, %v1147
      %v1156 = vadd.f32 %v1127, %v1148
      %v1157 = vld [vmem:[#allocation3 + $0x2] sm:$0xff]
      %v1158 = vld [vmem:[#allocation3 + $0x12] sm:$0xff]
      %v1159 = vld [vmem:[#allocation3 + $0x22] sm:$0xff]
      %v1160 = vld [vmem:[#allocation3 + $0x32] sm:$0xff]
      %v1161 = vld [vmem:[#allocation3 + $0x42] sm:$0xff]
      %v1162 = vld [vmem:[#allocation3 + $0x52] sm:$0xff]
      %v1163 = vld [vmem:[#allocation3 + $0x62] sm:$0xff]
      %v1164 = vld [vmem:[#allocation3 + $0x72] sm:$0xff]
      %v1165 = vld [vmem:[%s4 + $0x2] sm:$0x1]
      %v1166 = vlaneseq
      %v1167 = vshrl.u32 %v1166, 7
      %v1168 = vsub.s32 0, %v1167
      %v1169 = vrot.slane %v1165, %v1168
      %v1170 = vmul.f32 %v1157, %v1169
      %v1171 = vmul.f32 %v1158, %v1169
      %v1172 = vmul.f32 %v1159, %v1169
      %v1173 = vmul.f32 %v1160, %v1169
      %v1174 = vmul.f32 %v1161, %v1169
      %v1175 = vmul.f32 %v1162, %v1169
      %v1176 = vmul.f32 %v1163, %v1169
      %v1177 = vmul.f32 %v1164, %v1169
      %v1178 = vadd.f32 %v1149, %v1170
      %v1179 = vadd.f32 %v1150, %v1171
      %v1180 = vadd.f32 %v1151, %v1172
      %v1181 = vadd.f32 %v1152, %v1173
      %v1182 = vadd.f32 %v1153, %v1174
      %v1183 = vadd.f32 %v1154, %v1175
      %v1184 = vadd.f32 %v1155, %v1176
      %v1185 = vadd.f32 %v1156, %v1177
      %v1186 = vld [vmem:[%s628] sm:$0xff]
      %v1187 = vld [vmem:[%s628 + $0x10] sm:$0xff]
      %v1188 = vld [vmem:[%s628 + $0x20] sm:$0xff]
      %v1189 = vld [vmem:[%s628 + $0x30] sm:$0xff]
      %v1190 = vld [vmem:[%s628 + $0x40] sm:$0xff]
      %v1191 = vld [vmem:[%s628 + $0x50] sm:$0xff]
      %v1192 = vld [vmem:[%s628 + $0x60] sm:$0xff]
      %v1193 = vld [vmem:[%s628 + $0x70] sm:$0xff]
      %v1194 = vld [vmem:[%s4 + $0x3] sm:$0x1]
      %v1195 = vlaneseq
      %v1196 = vshrl.u32 %v1195, 7
      %v1197 = vsub.s32 0, %v1196
      %v1198 = vrot.slane %v1194, %v1197
      %v1199 = vmul.f32 %v1186, %v1198
      %v1200 = vmul.f32 %v1187, %v1198
      %v1201 = vmul.f32 %v1188, %v1198
      %v1202 = vmul.f32 %v1189, %v1198
      %v1203 = vmul.f32 %v1190, %v1198
      %v1204 = vmul.f32 %v1191, %v1198
      %v1205 = vmul.f32 %v1192, %v1198
      %v1206 = vmul.f32 %v1193, %v1198
      %v1207 = vadd.f32 %v1178, %v1199
      %v1208 = vadd.f32 %v1179, %v1200
      %v1209 = vadd.f32 %v1180, %v1201
      %v1210 = vadd.f32 %v1181, %v1202
      %v1211 = vadd.f32 %v1182, %v1203
      %v1212 = vadd.f32 %v1183, %v1204
      %v1213 = vadd.f32 %v1184, %v1205
      %v1214 = vadd.f32 %v1185, %v1206
      %v1215 = vld [vmem:[%s628 + $0x1] sm:$0xff]
      %v1216 = vld [vmem:[%s628 + $0x11] sm:$0xff]
      %v1217 = vld [vmem:[%s628 + $0x21] sm:$0xff]
      %v1218 = vld [vmem:[%s628 + $0x31] sm:$0xff]
      %v1219 = vld [vmem:[%s628 + $0x41] sm:$0xff]
      %v1220 = vld [vmem:[%s628 + $0x51] sm:$0xff]
      %v1221 = vld [vmem:[%s628 + $0x61] sm:$0xff]
      %v1222 = vld [vmem:[%s628 + $0x71] sm:$0xff]
      %v1223 = vld [vmem:[%s4 + $0x4] sm:$0x1]
      %v1224 = vlaneseq
      %v1225 = vshrl.u32 %v1224, 7
      %v1226 = vsub.s32 0, %v1225
      %v1227 = vrot.slane %v1223, %v1226
      %v1228 = vmul.f32 %v1215, %v1227
      %v1229 = vmul.f32 %v1216, %v1227
      %v1230 = vmul.f32 %v1217, %v1227
      %v1231 = vmul.f32 %v1218, %v1227
      %v1232 = vmul.f32 %v1219, %v1227
      %v1233 = vmul.f32 %v1220, %v1227
      %v1234 = vmul.f32 %v1221, %v1227
      %v1235 = vmul.f32 %v1222, %v1227
      %v1236 = vadd.f32 %v1207, %v1228
      %v1237 = vadd.f32 %v1208, %v1229
      %v1238 = vadd.f32 %v1209, %v1230
      %v1239 = vadd.f32 %v1210, %v1231
      %v1240 = vadd.f32 %v1211, %v1232
      %v1241 = vadd.f32 %v1212, %v1233
      %v1242 = vadd.f32 %v1213, %v1234
      %v1243 = vadd.f32 %v1214, %v1235
      %v1244 = vld [vmem:[%s628 + $0x2] sm:$0xff]
      %v1245 = vld [vmem:[%s628 + $0x12] sm:$0xff]
      %v1246 = vld [vmem:[%s628 + $0x22] sm:$0xff]
      %v1247 = vld [vmem:[%s628 + $0x32] sm:$0xff]
      %v1248 = vld [vmem:[%s628 + $0x42] sm:$0xff]
      %v1249 = vld [vmem:[%s628 + $0x52] sm:$0xff]
      %v1250 = vld [vmem:[%s628 + $0x62] sm:$0xff]
      %v1251 = vld [vmem:[%s628 + $0x72] sm:$0xff]
      %v1252 = vld [vmem:[%s4 + $0x5] sm:$0x1]
      %v1253 = vlaneseq
      %v1254 = vshrl.u32 %v1253, 7
      %v1255 = vsub.s32 0, %v1254
      %v1256 = vrot.slane %v1252, %v1255
      %v1257 = vmul.f32 %v1244, %v1256
      %v1258 = vmul.f32 %v1245, %v1256
      %v1259 = vmul.f32 %v1246, %v1256
      %v1260 = vmul.f32 %v1247, %v1256
      %v1261 = vmul.f32 %v1248, %v1256
      %v1262 = vmul.f32 %v1249, %v1256
      %v1263 = vmul.f32 %v1250, %v1256
      %v1264 = vmul.f32 %v1251, %v1256
      %v1265 = vadd.f32 %v1236, %v1257
      %v1266 = vadd.f32 %v1237, %v1258
      %v1267 = vadd.f32 %v1238, %v1259
      %v1268 = vadd.f32 %v1239, %v1260
      %v1269 = vadd.f32 %v1240, %v1261
      %v1270 = vadd.f32 %v1241, %v1262
      %v1271 = vadd.f32 %v1242, %v1263
      %v1272 = vadd.f32 %v1243, %v1264
      %s1273 = scalar_lea.vmem [#allocation3], 32
      %v1274 = vld [vmem:[%s1273] sm:$0xff]
      %v1275 = vld [vmem:[%s1273 + $0x10] sm:$0xff]
      %v1276 = vld [vmem:[%s1273 + $0x20] sm:$0xff]
      %v1277 = vld [vmem:[%s1273 + $0x30] sm:$0xff]
      %v1278 = vld [vmem:[%s1273 + $0x40] sm:$0xff]
      %v1279 = vld [vmem:[%s1273 + $0x50] sm:$0xff]
      %v1280 = vld [vmem:[%s1273 + $0x60] sm:$0xff]
      %v1281 = vld [vmem:[%s1273 + $0x70] sm:$0xff]
      %v1282 = vld [vmem:[%s4 + $0x6] sm:$0x1]
      %v1283 = vlaneseq
      %v1284 = vshrl.u32 %v1283, 7
      %v1285 = vsub.s32 0, %v1284
      %v1286 = vrot.slane %v1282, %v1285
      %v1287 = vmul.f32 %v1274, %v1286
      %v1288 = vmul.f32 %v1275, %v1286
      %v1289 = vmul.f32 %v1276, %v1286
      %v1290 = vmul.f32 %v1277, %v1286
      %v1291 = vmul.f32 %v1278, %v1286
      %v1292 = vmul.f32 %v1279, %v1286
      %v1293 = vmul.f32 %v1280, %v1286
      %v1294 = vmul.f32 %v1281, %v1286
      %v1295 = vadd.f32 %v1265, %v1287
      %v1296 = vadd.f32 %v1266, %v1288
      %v1297 = vadd.f32 %v1267, %v1289
      %v1298 = vadd.f32 %v1268, %v1290
      %v1299 = vadd.f32 %v1269, %v1291
      %v1300 = vadd.f32 %v1270, %v1292
      %v1301 = vadd.f32 %v1271, %v1293
      %v1302 = vadd.f32 %v1272, %v1294
      %v1303 = vld [vmem:[%s1273 + $0x1] sm:$0xff]
      %v1304 = vld [vmem:[%s1273 + $0x11] sm:$0xff]
      %v1305 = vld [vmem:[%s1273 + $0x21] sm:$0xff]
      %v1306 = vld [vmem:[%s1273 + $0x31] sm:$0xff]
      %v1307 = vld [vmem:[%s1273 + $0x41] sm:$0xff]
      %v1308 = vld [vmem:[%s1273 + $0x51] sm:$0xff]
      %v1309 = vld [vmem:[%s1273 + $0x61] sm:$0xff]
      %v1310 = vld [vmem:[%s1273 + $0x71] sm:$0xff]
      %v1311 = vld [vmem:[%s4 + $0x7] sm:$0x1]
      %v1312 = vlaneseq
      %v1313 = vshrl.u32 %v1312, 7
      %v1314 = vsub.s32 0, %v1313
      %v1315 = vrot.slane %v1311, %v1314
      %v1316 = vmul.f32 %v1303, %v1315
      %v1317 = vmul.f32 %v1304, %v1315
      %v1318 = vmul.f32 %v1305, %v1315
      %v1319 = vmul.f32 %v1306, %v1315
      %v1320 = vmul.f32 %v1307, %v1315
      %v1321 = vmul.f32 %v1308, %v1315
      %v1322 = vmul.f32 %v1309, %v1315
      %v1323 = vmul.f32 %v1310, %v1315
      %v1324 = vadd.f32 %v1295, %v1316
      %v1325 = vadd.f32 %v1296, %v1317
      %v1326 = vadd.f32 %v1297, %v1318
      %v1327 = vadd.f32 %v1298, %v1319
      %v1328 = vadd.f32 %v1299, %v1320
      %v1329 = vadd.f32 %v1300, %v1321
      %v1330 = vadd.f32 %v1301, %v1322
      %v1331 = vadd.f32 %v1302, %v1323
      %v1332 = vld [vmem:[%s1273 + $0x2] sm:$0xff]
      %v1333 = vld [vmem:[%s1273 + $0x12] sm:$0xff]
      %v1334 = vld [vmem:[%s1273 + $0x22] sm:$0xff]
      %v1335 = vld [vmem:[%s1273 + $0x32] sm:$0xff]
      %v1336 = vld [vmem:[%s1273 + $0x42] sm:$0xff]
      %v1337 = vld [vmem:[%s1273 + $0x52] sm:$0xff]
      %v1338 = vld [vmem:[%s1273 + $0x62] sm:$0xff]
      %v1339 = vld [vmem:[%s1273 + $0x72] sm:$0xff]
      %v1340 = vld [vmem:[%s4 + $0x8] sm:$0x1]
      %v1341 = vlaneseq
      %v1342 = vshrl.u32 %v1341, 7
      %v1343 = vsub.s32 0, %v1342
      %v1344 = vrot.slane %v1340, %v1343
      %v1345 = vmul.f32 %v1332, %v1344
      %v1346 = vmul.f32 %v1333, %v1344
      %v1347 = vmul.f32 %v1334, %v1344
      %v1348 = vmul.f32 %v1335, %v1344
      %v1349 = vmul.f32 %v1336, %v1344
      %v1350 = vmul.f32 %v1337, %v1344
      %v1351 = vmul.f32 %v1338, %v1344
      %v1352 = vmul.f32 %v1339, %v1344
      %v1353 = vadd.f32 %v1324, %v1345
      %v1354 = vadd.f32 %v1325, %v1346
      %v1355 = vadd.f32 %v1326, %v1347
      %v1356 = vadd.f32 %v1327, %v1348
      %v1357 = vadd.f32 %v1328, %v1349
      %v1358 = vadd.f32 %v1329, %v1350
      %v1359 = vadd.f32 %v1330, %v1351
      %v1360 = vadd.f32 %v1331, %v1352
      %v1362 = vsel %vm925, %v916, 0
      %v1365 = vsel %vm925, %v917, 0
      %v1368 = vsel %vm925, %v918, 0
      %v1371 = vsel %vm925, %v919, 0
      %v1374 = vsel %vm925, %v920, 0
      %v1377 = vsel %vm925, %v921, 0
      %v1380 = vsel %vm925, %v922, 0
      %v1383 = vsel %vm925, %v923, 0
      %1385 = vmatprep.subr.mxu0 0.0
      %1386 = vmatpush1.msra.mxu0 0.0
      %1387 = vmatprep.subr.mxu0 0.0
      %1388 = vmatpush1.msra.mxu0 0.0
      %1389 = vmatprep.subr.mxu0 0.0
      %1390 = vmatpush1.msra.mxu0 0.0
      %1391 = vmatprep.subr.mxu0 0.0
      %1392 = vmatpush1.msra.mxu0 0.0
      %1393 = vmatprep.subr.mxu0 0.0
      %1394 = vmatpush1.msra.mxu0 0.0
      %1395 = vmatprep.subr.mxu0 0.0
      %1396 = vmatpush1.msra.mxu0 0.0
      %1397 = vmatprep.subr.mxu0 0.0
      %1398 = vmatpush1.msra.mxu0 0.0
      %1399 = vmatprep.subr.mxu0 0.0
      %1400 = vmatpush1.msra.mxu0 0.0
      %1401 = vmatprep.subr.mxu0 0.0
      %1402 = vmatpush1.msra.mxu0 0.0
      %1403 = vmatprep.subr.mxu0 0.0
      %1404 = vmatpush1.msra.mxu0 0.0
      %1405 = vmatprep.subr.mxu0 0.0
      %1406 = vmatpush1.msra.mxu0 0.0
      %1407 = vmatprep.subr.mxu0 0.0
      %1408 = vmatpush1.msra.mxu0 0.0
      %1409 = vmatprep.subr.mxu0 0.0
      %1410 = vmatpush1.msra.mxu0 0.0
      %1411 = vmatprep.subr.mxu0 0.0
      %1412 = vmatpush1.msra.mxu0 0.0
      %1413 = vmatprep.subr.mxu0 0.0
      %1414 = vmatpush1.msra.mxu0 0.0
      %1415 = vmatprep.subr.mxu0 0.0
      %1416 = vmatpush1.msra.mxu0 %v952
      %1417 = vmatprep.subr.mxu0 0.0
      %1418 = vmatpush2.msra.mxu0 0.0
      %1419 = vmatprep.subr.mxu0 0.0
      %1420 = vmatpush2.msra.mxu0 0.0
      %1421 = vmatprep.subr.mxu0 0.0
      %1422 = vmatpush2.msra.mxu0 0.0
      %1423 = vmatprep.subr.mxu0 0.0
      %1424 = vmatpush2.msra.mxu0 0.0
      %1425 = vmatprep.subr.mxu0 0.0
      %1426 = vmatpush2.msra.mxu0 0.0
      %1427 = vmatprep.subr.mxu0 0.0
      %1428 = vmatpush2.msra.mxu0 0.0
      %1429 = vmatprep.subr.mxu0 0.0
      %1430 = vmatpush2.msra.mxu0 0.0
      %1431 = vmatprep.subr.mxu0 0.0
      %1432 = vmatpush2.msra.mxu0 0.0
      %1433 = vmatprep.subr.mxu0 0.0
      %1434 = vmatpush2.msra.mxu0 0.0
      %1435 = vmatprep.subr.mxu0 0.0
      %1436 = vmatpush2.msra.mxu0 0.0
      %1437 = vmatprep.subr.mxu0 0.0
      %1438 = vmatpush2.msra.mxu0 0.0
      %1439 = vmatprep.subr.mxu0 0.0
      %1440 = vmatpush2.msra.mxu0 0.0
      %1441 = vmatprep.subr.mxu0 0.0
      %1442 = vmatpush2.msra.mxu0 0.0
      %1443 = vmatprep.subr.mxu0 0.0
      %1444 = vmatpush2.msra.mxu0 0.0
      %1445 = vmatprep.subr.mxu0 0.0
      %1446 = vmatpush2.msra.mxu0 0.0
      %1447 = vmatprep.subr.mxu0 0.0
      %1448 = vmatpush2.msra.mxu0 0.0
      %1449 = vmatprep.mubr.f32.mxu0 0.0
      %1450 = vmatmul.mubr.f32.gmra.mxu0 %v1362
      %v1451 = vpop.f32.mrf.mxu0
      %v1452 = vadd.f32 0.0, %v1451
      %v1453 = vpop.f32.mrf.mxu0
      %1454 = vmatprep.mubr.f32.mxu0 0.0
      %1455 = vmatmul.mubr.f32.gmra.mxu0 %v1365
      %v1456 = vpop.f32.mrf.mxu0
      %v1457 = vadd.f32 0.0, %v1456
      %v1458 = vpop.f32.mrf.mxu0
      %1459 = vmatprep.mubr.f32.mxu0 0.0
      %1460 = vmatmul.mubr.f32.gmra.mxu0 %v1368
      %v1461 = vpop.f32.mrf.mxu0
      %v1462 = vadd.f32 0.0, %v1461
      %v1463 = vpop.f32.mrf.mxu0
      %1464 = vmatprep.mubr.f32.mxu0 0.0
      %1465 = vmatmul.mubr.f32.gmra.mxu0 %v1371
      %v1466 = vpop.f32.mrf.mxu0
      %v1467 = vadd.f32 0.0, %v1466
      %v1468 = vpop.f32.mrf.mxu0
      %1469 = vmatprep.mubr.f32.mxu0 0.0
      %1470 = vmatmul.mubr.f32.gmra.mxu0 %v1374
      %v1471 = vpop.f32.mrf.mxu0
      %v1472 = vadd.f32 0.0, %v1471
      %v1473 = vpop.f32.mrf.mxu0
      %1474 = vmatprep.mubr.f32.mxu0 0.0
      %1475 = vmatmul.mubr.f32.gmra.mxu0 %v1377
      %v1476 = vpop.f32.mrf.mxu0
      %v1477 = vadd.f32 0.0, %v1476
      %v1478 = vpop.f32.mrf.mxu0
      %1479 = vmatprep.mubr.f32.mxu0 0.0
      %1480 = vmatmul.mubr.f32.gmra.mxu0 %v1380
      %v1481 = vpop.f32.mrf.mxu0
      %v1482 = vadd.f32 0.0, %v1481
      %v1483 = vpop.f32.mrf.mxu0
      %1484 = vmatprep.mubr.f32.mxu0 0.0
      %1485 = vmatmul.mubr.f32.gmra.mxu0 %v1383
      %v1486 = vpop.f32.mrf.mxu0
      %v1487 = vadd.f32 0.0, %v1486
      %v1488 = vpop.f32.mrf.mxu0
      %1489 = vdwg.mxu0
      %v1490 = vmul.f32 %v1353, %v1452
      %v1491 = vmul.f32 %v1354, %v1457
      %v1492 = vmul.f32 %v1355, %v1462
      %v1493 = vmul.f32 %v1356, %v1467
      %v1494 = vmul.f32 %v1357, %v1472
      %v1495 = vmul.f32 %v1358, %v1477
      %v1496 = vmul.f32 %v1359, %v1482
      %v1497 = vmul.f32 %v1360, %v1487
      %v1498 = vadd.f32 %v1490, 0.0
      %v1499 = vadd.f32 %v1491, 0.0
      %v1500 = vadd.f32 %v1492, 0.0
      %v1501 = vadd.f32 %v1493, 0.0
      %v1502 = vadd.f32 %v1494, 0.0
      %v1503 = vadd.f32 %v1495, 0.0
      %v1504 = vadd.f32 %v1496, 0.0
      %v1505 = vadd.f32 %v1497, 0.0
      %1506 = vrot.lane.b32.xlu0 %v583, 126
      %v1507 = vpop.permute.xlu0 %1506
      %1508 = vrot.lane.b32.xlu0 %v585, 126
      %v1509 = vpop.permute.xlu0 %1508
      %1510 = vrot.lane.b32.xlu0 %v587, 126
      %v1511 = vpop.permute.xlu0 %1510
      %1512 = vrot.lane.b32.xlu0 %v589, 126
      %v1513 = vpop.permute.xlu0 %1512
      %1514 = vrot.lane.b32.xlu0 %v591, 126
      %v1515 = vpop.permute.xlu0 %1514
      %1516 = vrot.lane.b32.xlu0 %v593, 126
      %v1517 = vpop.permute.xlu0 %1516
      %1518 = vrot.lane.b32.xlu0 %v595, 126
      %v1519 = vpop.permute.xlu0 %1518
      %1520 = vrot.lane.b32.xlu0 %v597, 126
      %v1521 = vpop.permute.xlu0 %1520
      %v1522 = vsel %vm925, %v1507, 0
      %v1524 = vsel %vm925, %v1509, 0
      %v1526 = vsel %vm925, %v1511, 0
      %v1528 = vsel %vm925, %v1513, 0
      %v1530 = vsel %vm925, %v1515, 0
      %v1532 = vsel %vm925, %v1517, 0
      %v1534 = vsel %vm925, %v1519, 0
      %v1536 = vsel %vm925, %v1521, 0
      %1538 = vmatprep.subr.mxu0 0.0
      %1539 = vmatpush1.msra.mxu0 0.0
      %1540 = vmatprep.subr.mxu0 0.0
      %1541 = vmatpush1.msra.mxu0 0.0
      %1542 = vmatprep.subr.mxu0 0.0
      %1543 = vmatpush1.msra.mxu0 0.0
      %1544 = vmatprep.subr.mxu0 0.0
      %1545 = vmatpush1.msra.mxu0 0.0
      %1546 = vmatprep.subr.mxu0 0.0
      %1547 = vmatpush1.msra.mxu0 0.0
      %1548 = vmatprep.subr.mxu0 0.0
      %1549 = vmatpush1.msra.mxu0 0.0
      %1550 = vmatprep.subr.mxu0 0.0
      %1551 = vmatpush1.msra.mxu0 0.0
      %1552 = vmatprep.subr.mxu0 0.0
      %1553 = vmatpush1.msra.mxu0 0.0
      %1554 = vmatprep.subr.mxu0 0.0
      %1555 = vmatpush1.msra.mxu0 0.0
      %1556 = vmatprep.subr.mxu0 0.0
      %1557 = vmatpush1.msra.mxu0 0.0
      %1558 = vmatprep.subr.mxu0 0.0
      %1559 = vmatpush1.msra.mxu0 0.0
      %1560 = vmatprep.subr.mxu0 0.0
      %1561 = vmatpush1.msra.mxu0 0.0
      %1562 = vmatprep.subr.mxu0 0.0
      %1563 = vmatpush1.msra.mxu0 0.0
      %1564 = vmatprep.subr.mxu0 0.0
      %1565 = vmatpush1.msra.mxu0 0.0
      %1566 = vmatprep.subr.mxu0 0.0
      %1567 = vmatpush1.msra.mxu0 0.0
      %1568 = vmatprep.subr.mxu0 0.0
      %1569 = vmatpush1.msra.mxu0 %v952
      %1570 = vmatprep.subr.mxu0 0.0
      %1571 = vmatpush2.msra.mxu0 0.0
      %1572 = vmatprep.subr.mxu0 0.0
      %1573 = vmatpush2.msra.mxu0 0.0
      %1574 = vmatprep.subr.mxu0 0.0
      %1575 = vmatpush2.msra.mxu0 0.0
      %1576 = vmatprep.subr.mxu0 0.0
      %1577 = vmatpush2.msra.mxu0 0.0
      %1578 = vmatprep.subr.mxu0 0.0
      %1579 = vmatpush2.msra.mxu0 0.0
      %1580 = vmatprep.subr.mxu0 0.0
      %1581 = vmatpush2.msra.mxu0 0.0
      %1582 = vmatprep.subr.mxu0 0.0
      %1583 = vmatpush2.msra.mxu0 0.0
      %1584 = vmatprep.subr.mxu0 0.0
      %1585 = vmatpush2.msra.mxu0 0.0
      %1586 = vmatprep.subr.mxu0 0.0
      %1587 = vmatpush2.msra.mxu0 0.0
      %1588 = vmatprep.subr.mxu0 0.0
      %1589 = vmatpush2.msra.mxu0 0.0
      %1590 = vmatprep.subr.mxu0 0.0
      %1591 = vmatpush2.msra.mxu0 0.0
      %1592 = vmatprep.subr.mxu0 0.0
      %1593 = vmatpush2.msra.mxu0 0.0
      %1594 = vmatprep.subr.mxu0 0.0
      %1595 = vmatpush2.msra.mxu0 0.0
      %1596 = vmatprep.subr.mxu0 0.0
      %1597 = vmatpush2.msra.mxu0 0.0
      %1598 = vmatprep.subr.mxu0 0.0
      %1599 = vmatpush2.msra.mxu0 0.0
      %1600 = vmatprep.subr.mxu0 0.0
      %1601 = vmatpush2.msra.mxu0 0.0
      %1602 = vmatprep.mubr.f32.mxu0 0.0
      %1603 = vmatmul.mubr.f32.gmra.mxu0 %v1522
      %v1604 = vpop.f32.mrf.mxu0
      %v1605 = vadd.f32 0.0, %v1604
      %v1606 = vpop.f32.mrf.mxu0
      %1607 = vmatprep.mubr.f32.mxu0 0.0
      %1608 = vmatmul.mubr.f32.gmra.mxu0 %v1524
      %v1609 = vpop.f32.mrf.mxu0
      %v1610 = vadd.f32 0.0, %v1609
      %v1611 = vpop.f32.mrf.mxu0
      %1612 = vmatprep.mubr.f32.mxu0 0.0
      %1613 = vmatmul.mubr.f32.gmra.mxu0 %v1526
      %v1614 = vpop.f32.mrf.mxu0
      %v1615 = vadd.f32 0.0, %v1614
      %v1616 = vpop.f32.mrf.mxu0
      %1617 = vmatprep.mubr.f32.mxu0 0.0
      %1618 = vmatmul.mubr.f32.gmra.mxu0 %v1528
      %v1619 = vpop.f32.mrf.mxu0
      %v1620 = vadd.f32 0.0, %v1619
      %v1621 = vpop.f32.mrf.mxu0
      %1622 = vmatprep.mubr.f32.mxu0 0.0
      %1623 = vmatmul.mubr.f32.gmra.mxu0 %v1530
      %v1624 = vpop.f32.mrf.mxu0
      %v1625 = vadd.f32 0.0, %v1624
      %v1626 = vpop.f32.mrf.mxu0
      %1627 = vmatprep.mubr.f32.mxu0 0.0
      %1628 = vmatmul.mubr.f32.gmra.mxu0 %v1532
      %v1629 = vpop.f32.mrf.mxu0
      %v1630 = vadd.f32 0.0, %v1629
      %v1631 = vpop.f32.mrf.mxu0
      %1632 = vmatprep.mubr.f32.mxu0 0.0
      %1633 = vmatmul.mubr.f32.gmra.mxu0 %v1534
      %v1634 = vpop.f32.mrf.mxu0
      %v1635 = vadd.f32 0.0, %v1634
      %v1636 = vpop.f32.mrf.mxu0
      %1637 = vmatprep.mubr.f32.mxu0 0.0
      %1638 = vmatmul.mubr.f32.gmra.mxu0 %v1536
      %v1639 = vpop.f32.mrf.mxu0
      %v1640 = vadd.f32 0.0, %v1639
      %v1641 = vpop.f32.mrf.mxu0
      %1642 = vdwg.mxu0
      %v1643 = vmul.f32 %v1605, %v1060
      %v1644 = vmul.f32 %v1610, %v1062
      %v1645 = vmul.f32 %v1615, %v1064
      %v1646 = vmul.f32 %v1620, %v1066
      %v1647 = vmul.f32 %v1625, %v1068
      %v1648 = vmul.f32 %v1630, %v1070
      %v1649 = vmul.f32 %v1635, %v1072
      %v1650 = vmul.f32 %v1640, %v1074
      %1651 = vst.msk [vmem:[%s628 + $0x1] sm:$0xff] %vm288, %v1643
      %1652 = vst.msk [vmem:[%s628 + $0x11] sm:$0xff] %vm288, %v1644
      %1653 = vst.msk [vmem:[%s628 + $0x21] sm:$0xff] %vm288, %v1645
      %1654 = vst.msk [vmem:[%s628 + $0x31] sm:$0xff] %vm288, %v1646
      %1655 = vst.msk [vmem:[%s628 + $0x41] sm:$0xff] %vm288, %v1647
      %1656 = vst.msk [vmem:[%s628 + $0x51] sm:$0xff] %vm288, %v1648
      %1657 = vst.msk [vmem:[%s628 + $0x61] sm:$0xff] %vm288, %v1649
      %1658 = vst.msk [vmem:[%s628 + $0x71] sm:$0xff] %vm288, %v1650
      %v1659 = vld [vmem:[#allocation3] sm:$0xff]
      %v1660 = vld [vmem:[#allocation3 + $0x10] sm:$0xff]
      %v1661 = vld [vmem:[#allocation3 + $0x20] sm:$0xff]
      %v1662 = vld [vmem:[#allocation3 + $0x30] sm:$0xff]
      %v1663 = vld [vmem:[#allocation3 + $0x40] sm:$0xff]
      %v1664 = vld [vmem:[#allocation3 + $0x50] sm:$0xff]
      %v1665 = vld [vmem:[#allocation3 + $0x60] sm:$0xff]
      %v1666 = vld [vmem:[#allocation3 + $0x70] sm:$0xff]
      %v1667 = vld [vmem:[%s4] sm:$0x1]
      %v1668 = vlaneseq
      %v1669 = vshrl.u32 %v1668, 7
      %v1670 = vsub.s32 0, %v1669
      %v1671 = vrot.slane %v1667, %v1670
      %1673 = vrot.lane.b32.xlu0 %v1671, 120
      %v1674 = vpop.permute.xlu0 %1673
      %v1676 = vmul.f32 %v1659, %v1674
      %v1677 = vmul.f32 %v1660, %v1674
      %v1678 = vmul.f32 %v1661, %v1674
      %v1679 = vmul.f32 %v1662, %v1674
      %v1680 = vmul.f32 %v1663, %v1674
      %v1681 = vmul.f32 %v1664, %v1674
      %v1682 = vmul.f32 %v1665, %v1674
      %v1683 = vmul.f32 %v1666, %v1674
      %v1684 = vadd.f32 %v1676, 0.0
      %v1685 = vadd.f32 %v1677, 0.0
      %v1686 = vadd.f32 %v1678, 0.0
      %v1687 = vadd.f32 %v1679, 0.0
      %v1688 = vadd.f32 %v1680, 0.0
      %v1689 = vadd.f32 %v1681, 0.0
      %v1690 = vadd.f32 %v1682, 0.0
      %v1691 = vadd.f32 %v1683, 0.0
      %v1692 = vld [vmem:[#allocation3 + $0x1] sm:$0xff]
      %v1693 = vld [vmem:[#allocation3 + $0x11] sm:$0xff]
      %v1694 = vld [vmem:[#allocation3 + $0x21] sm:$0xff]
      %v1695 = vld [vmem:[#allocation3 + $0x31] sm:$0xff]
      %v1696 = vld [vmem:[#allocation3 + $0x41] sm:$0xff]
      %v1697 = vld [vmem:[#allocation3 + $0x51] sm:$0xff]
      %v1698 = vld [vmem:[#allocation3 + $0x61] sm:$0xff]
      %v1699 = vld [vmem:[#allocation3 + $0x71] sm:$0xff]
      %v1700 = vld [vmem:[%s4 + $0x1] sm:$0x1]
      %v1701 = vlaneseq
      %v1702 = vshrl.u32 %v1701, 7
      %v1703 = vsub.s32 0, %v1702
      %v1704 = vrot.slane %v1700, %v1703
      %1706 = vrot.lane.b32.xlu0 %v1704, 120
      %v1707 = vpop.permute.xlu0 %1706
      %v1709 = vmul.f32 %v1692, %v1707
      %v1710 = vmul.f32 %v1693, %v1707
      %v1711 = vmul.f32 %v1694, %v1707
      %v1712 = vmul.f32 %v1695, %v1707
      %v1713 = vmul.f32 %v1696, %v1707
      %v1714 = vmul.f32 %v1697, %v1707
      %v1715 = vmul.f32 %v1698, %v1707
      %v1716 = vmul.f32 %v1699, %v1707
      %v1717 = vadd.f32 %v1684, %v1709
      %v1718 = vadd.f32 %v1685, %v1710
      %v1719 = vadd.f32 %v1686, %v1711
      %v1720 = vadd.f32 %v1687, %v1712
      %v1721 = vadd.f32 %v1688, %v1713
      %v1722 = vadd.f32 %v1689, %v1714
      %v1723 = vadd.f32 %v1690, %v1715
      %v1724 = vadd.f32 %v1691, %v1716
      %v1725 = vld [vmem:[#allocation3 + $0x2] sm:$0xff]
      %v1726 = vld [vmem:[#allocation3 + $0x12] sm:$0xff]
      %v1727 = vld [vmem:[#allocation3 + $0x22] sm:$0xff]
      %v1728 = vld [vmem:[#allocation3 + $0x32] sm:$0xff]
      %v1729 = vld [vmem:[#allocation3 + $0x42] sm:$0xff]
      %v1730 = vld [vmem:[#allocation3 + $0x52] sm:$0xff]
      %v1731 = vld [vmem:[#allocation3 + $0x62] sm:$0xff]
      %v1732 = vld [vmem:[#allocation3 + $0x72] sm:$0xff]
      %v1733 = vld [vmem:[%s4 + $0x2] sm:$0x1]
      %v1734 = vlaneseq
      %v1735 = vshrl.u32 %v1734, 7
      %v1736 = vsub.s32 0, %v1735
      %v1737 = vrot.slane %v1733, %v1736
      %1739 = vrot.lane.b32.xlu0 %v1737, 120
      %v1740 = vpop.permute.xlu0 %1739
      %v1742 = vmul.f32 %v1725, %v1740
      %v1743 = vmul.f32 %v1726, %v1740
      %v1744 = vmul.f32 %v1727, %v1740
      %v1745 = vmul.f32 %v1728, %v1740
      %v1746 = vmul.f32 %v1729, %v1740
      %v1747 = vmul.f32 %v1730, %v1740
      %v1748 = vmul.f32 %v1731, %v1740
      %v1749 = vmul.f32 %v1732, %v1740
      %v1750 = vadd.f32 %v1717, %v1742
      %v1751 = vadd.f32 %v1718, %v1743
      %v1752 = vadd.f32 %v1719, %v1744
      %v1753 = vadd.f32 %v1720, %v1745
      %v1754 = vadd.f32 %v1721, %v1746
      %v1755 = vadd.f32 %v1722, %v1747
      %v1756 = vadd.f32 %v1723, %v1748
      %v1757 = vadd.f32 %v1724, %v1749
      %v1758 = vld [vmem:[%s628] sm:$0xff]
      %v1759 = vld [vmem:[%s628 + $0x10] sm:$0xff]
      %v1760 = vld [vmem:[%s628 + $0x20] sm:$0xff]
      %v1761 = vld [vmem:[%s628 + $0x30] sm:$0xff]
      %v1762 = vld [vmem:[%s628 + $0x40] sm:$0xff]
      %v1763 = vld [vmem:[%s628 + $0x50] sm:$0xff]
      %v1764 = vld [vmem:[%s628 + $0x60] sm:$0xff]
      %v1765 = vld [vmem:[%s628 + $0x70] sm:$0xff]
      %v1766 = vld [vmem:[%s4 + $0x3] sm:$0x1]
      %v1767 = vlaneseq
      %v1768 = vshrl.u32 %v1767, 7
      %v1769 = vsub.s32 0, %v1768
      %v1770 = vrot.slane %v1766, %v1769
      %1772 = vrot.lane.b32.xlu0 %v1770, 120
      %v1773 = vpop.permute.xlu0 %1772
      %v1775 = vmul.f32 %v1758, %v1773
      %v1776 = vmul.f32 %v1759, %v1773
      %v1777 = vmul.f32 %v1760, %v1773
      %v1778 = vmul.f32 %v1761, %v1773
      %v1779 = vmul.f32 %v1762, %v1773
      %v1780 = vmul.f32 %v1763, %v1773
      %v1781 = vmul.f32 %v1764, %v1773
      %v1782 = vmul.f32 %v1765, %v1773
      %v1783 = vadd.f32 %v1750, %v1775
      %v1784 = vadd.f32 %v1751, %v1776
      %v1785 = vadd.f32 %v1752, %v1777
      %v1786 = vadd.f32 %v1753, %v1778
      %v1787 = vadd.f32 %v1754, %v1779
      %v1788 = vadd.f32 %v1755, %v1780
      %v1789 = vadd.f32 %v1756, %v1781
      %v1790 = vadd.f32 %v1757, %v1782
      %v1791 = vld [vmem:[%s628 + $0x1] sm:$0xff]
      %v1792 = vld [vmem:[%s628 + $0x11] sm:$0xff]
      %v1793 = vld [vmem:[%s628 + $0x21] sm:$0xff]
      %v1794 = vld [vmem:[%s628 + $0x31] sm:$0xff]
      %v1795 = vld [vmem:[%s628 + $0x41] sm:$0xff]
      %v1796 = vld [vmem:[%s628 + $0x51] sm:$0xff]
      %v1797 = vld [vmem:[%s628 + $0x61] sm:$0xff]
      %v1798 = vld [vmem:[%s628 + $0x71] sm:$0xff]
      %v1799 = vld [vmem:[%s4 + $0x4] sm:$0x1]
      %v1800 = vlaneseq
      %v1801 = vshrl.u32 %v1800, 7
      %v1802 = vsub.s32 0, %v1801
      %v1803 = vrot.slane %v1799, %v1802
      %1805 = vrot.lane.b32.xlu0 %v1803, 120
      %v1806 = vpop.permute.xlu0 %1805
      %v1808 = vmul.f32 %v1791, %v1806
      %v1809 = vmul.f32 %v1792, %v1806
      %v1810 = vmul.f32 %v1793, %v1806
      %v1811 = vmul.f32 %v1794, %v1806
      %v1812 = vmul.f32 %v1795, %v1806
      %v1813 = vmul.f32 %v1796, %v1806
      %v1814 = vmul.f32 %v1797, %v1806
      %v1815 = vmul.f32 %v1798, %v1806
      %v1816 = vadd.f32 %v1783, %v1808
      %v1817 = vadd.f32 %v1784, %v1809
      %v1818 = vadd.f32 %v1785, %v1810
      %v1819 = vadd.f32 %v1786, %v1811
      %v1820 = vadd.f32 %v1787, %v1812
      %v1821 = vadd.f32 %v1788, %v1813
      %v1822 = vadd.f32 %v1789, %v1814
      %v1823 = vadd.f32 %v1790, %v1815
      %v1824 = vld [vmem:[%s628 + $0x2] sm:$0xff]
      %v1825 = vld [vmem:[%s628 + $0x12] sm:$0xff]
      %v1826 = vld [vmem:[%s628 + $0x22] sm:$0xff]
      %v1827 = vld [vmem:[%s628 + $0x32] sm:$0xff]
      %v1828 = vld [vmem:[%s628 + $0x42] sm:$0xff]
      %v1829 = vld [vmem:[%s628 + $0x52] sm:$0xff]
      %v1830 = vld [vmem:[%s628 + $0x62] sm:$0xff]
      %v1831 = vld [vmem:[%s628 + $0x72] sm:$0xff]
      %v1832 = vld [vmem:[%s4 + $0x5] sm:$0x1]
      %v1833 = vlaneseq
      %v1834 = vshrl.u32 %v1833, 7
      %v1835 = vsub.s32 0, %v1834
      %v1836 = vrot.slane %v1832, %v1835
      %1838 = vrot.lane.b32.xlu0 %v1836, 120
      %v1839 = vpop.permute.xlu0 %1838
      %v1841 = vmul.f32 %v1824, %v1839
      %v1842 = vmul.f32 %v1825, %v1839
      %v1843 = vmul.f32 %v1826, %v1839
      %v1844 = vmul.f32 %v1827, %v1839
      %v1845 = vmul.f32 %v1828, %v1839
      %v1846 = vmul.f32 %v1829, %v1839
      %v1847 = vmul.f32 %v1830, %v1839
      %v1848 = vmul.f32 %v1831, %v1839
      %v1849 = vadd.f32 %v1816, %v1841
      %v1850 = vadd.f32 %v1817, %v1842
      %v1851 = vadd.f32 %v1818, %v1843
      %v1852 = vadd.f32 %v1819, %v1844
      %v1853 = vadd.f32 %v1820, %v1845
      %v1854 = vadd.f32 %v1821, %v1846
      %v1855 = vadd.f32 %v1822, %v1847
      %v1856 = vadd.f32 %v1823, %v1848
      %v1857 = vld [vmem:[%s1273] sm:$0xff]
      %v1858 = vld [vmem:[%s1273 + $0x10] sm:$0xff]
      %v1859 = vld [vmem:[%s1273 + $0x20] sm:$0xff]
      %v1860 = vld [vmem:[%s1273 + $0x30] sm:$0xff]
      %v1861 = vld [vmem:[%s1273 + $0x40] sm:$0xff]
      %v1862 = vld [vmem:[%s1273 + $0x50] sm:$0xff]
      %v1863 = vld [vmem:[%s1273 + $0x60] sm:$0xff]
      %v1864 = vld [vmem:[%s1273 + $0x70] sm:$0xff]
      %v1865 = vld [vmem:[%s4 + $0x6] sm:$0x1]
      %v1866 = vlaneseq
      %v1867 = vshrl.u32 %v1866, 7
      %v1868 = vsub.s32 0, %v1867
      %v1869 = vrot.slane %v1865, %v1868
      %1871 = vrot.lane.b32.xlu0 %v1869, 120
      %v1872 = vpop.permute.xlu0 %1871
      %v1874 = vmul.f32 %v1857, %v1872
      %v1875 = vmul.f32 %v1858, %v1872
      %v1876 = vmul.f32 %v1859, %v1872
      %v1877 = vmul.f32 %v1860, %v1872
      %v1878 = vmul.f32 %v1861, %v1872
      %v1879 = vmul.f32 %v1862, %v1872
      %v1880 = vmul.f32 %v1863, %v1872
      %v1881 = vmul.f32 %v1864, %v1872
      %v1882 = vadd.f32 %v1849, %v1874
      %v1883 = vadd.f32 %v1850, %v1875
      %v1884 = vadd.f32 %v1851, %v1876
      %v1885 = vadd.f32 %v1852, %v1877
      %v1886 = vadd.f32 %v1853, %v1878
      %v1887 = vadd.f32 %v1854, %v1879
      %v1888 = vadd.f32 %v1855, %v1880
      %v1889 = vadd.f32 %v1856, %v1881
      %v1890 = vld [vmem:[%s1273 + $0x1] sm:$0xff]
      %v1891 = vld [vmem:[%s1273 + $0x11] sm:$0xff]
      %v1892 = vld [vmem:[%s1273 + $0x21] sm:$0xff]
      %v1893 = vld [vmem:[%s1273 + $0x31] sm:$0xff]
      %v1894 = vld [vmem:[%s1273 + $0x41] sm:$0xff]
      %v1895 = vld [vmem:[%s1273 + $0x51] sm:$0xff]
      %v1896 = vld [vmem:[%s1273 + $0x61] sm:$0xff]
      %v1897 = vld [vmem:[%s1273 + $0x71] sm:$0xff]
      %v1898 = vld [vmem:[%s4 + $0x7] sm:$0x1]
      %v1899 = vlaneseq
      %v1900 = vshrl.u32 %v1899, 7
      %v1901 = vsub.s32 0, %v1900
      %v1902 = vrot.slane %v1898, %v1901
      %1904 = vrot.lane.b32.xlu0 %v1902, 120
      %v1905 = vpop.permute.xlu0 %1904
      %v1907 = vmul.f32 %v1890, %v1905
      %v1908 = vmul.f32 %v1891, %v1905
      %v1909 = vmul.f32 %v1892, %v1905
      %v1910 = vmul.f32 %v1893, %v1905
      %v1911 = vmul.f32 %v1894, %v1905
      %v1912 = vmul.f32 %v1895, %v1905
      %v1913 = vmul.f32 %v1896, %v1905
      %v1914 = vmul.f32 %v1897, %v1905
      %v1915 = vadd.f32 %v1882, %v1907
      %v1916 = vadd.f32 %v1883, %v1908
      %v1917 = vadd.f32 %v1884, %v1909
      %v1918 = vadd.f32 %v1885, %v1910
      %v1919 = vadd.f32 %v1886, %v1911
      %v1920 = vadd.f32 %v1887, %v1912
      %v1921 = vadd.f32 %v1888, %v1913
      %v1922 = vadd.f32 %v1889, %v1914
      %v1923 = vld [vmem:[%s1273 + $0x2] sm:$0xff]
      %v1924 = vld [vmem:[%s1273 + $0x12] sm:$0xff]
      %v1925 = vld [vmem:[%s1273 + $0x22] sm:$0xff]
      %v1926 = vld [vmem:[%s1273 + $0x32] sm:$0xff]
      %v1927 = vld [vmem:[%s1273 + $0x42] sm:$0xff]
      %v1928 = vld [vmem:[%s1273 + $0x52] sm:$0xff]
      %v1929 = vld [vmem:[%s1273 + $0x62] sm:$0xff]
      %v1930 = vld [vmem:[%s1273 + $0x72] sm:$0xff]
      %v1931 = vld [vmem:[%s4 + $0x8] sm:$0x1]
      %v1932 = vlaneseq
      %v1933 = vshrl.u32 %v1932, 7
      %v1934 = vsub.s32 0, %v1933
      %v1935 = vrot.slane %v1931, %v1934
      %1937 = vrot.lane.b32.xlu0 %v1935, 120
      %v1938 = vpop.permute.xlu0 %1937
      %v1940 = vmul.f32 %v1923, %v1938
      %v1941 = vmul.f32 %v1924, %v1938
      %v1942 = vmul.f32 %v1925, %v1938
      %v1943 = vmul.f32 %v1926, %v1938
      %v1944 = vmul.f32 %v1927, %v1938
      %v1945 = vmul.f32 %v1928, %v1938
      %v1946 = vmul.f32 %v1929, %v1938
      %v1947 = vmul.f32 %v1930, %v1938
      %v1948 = vadd.f32 %v1915, %v1940
      %v1949 = vadd.f32 %v1916, %v1941
      %v1950 = vadd.f32 %v1917, %v1942
      %v1951 = vadd.f32 %v1918, %v1943
      %v1952 = vadd.f32 %v1919, %v1944
      %v1953 = vadd.f32 %v1920, %v1945
      %v1954 = vadd.f32 %v1921, %v1946
      %v1955 = vadd.f32 %v1922, %v1947
      %1956 = vrot.lane.b32.xlu0 %v916, 126
      %v1957 = vpop.permute.xlu0 %1956
      %1958 = vrot.lane.b32.xlu0 %v917, 126
      %v1959 = vpop.permute.xlu0 %1958
      %1960 = vrot.lane.b32.xlu0 %v918, 126
      %v1961 = vpop.permute.xlu0 %1960
      %1962 = vrot.lane.b32.xlu0 %v919, 126
      %v1963 = vpop.permute.xlu0 %1962
      %1964 = vrot.lane.b32.xlu0 %v920, 126
      %v1965 = vpop.permute.xlu0 %1964
      %1966 = vrot.lane.b32.xlu0 %v921, 126
      %v1967 = vpop.permute.xlu0 %1966
      %1968 = vrot.lane.b32.xlu0 %v922, 126
      %v1969 = vpop.permute.xlu0 %1968
      %1970 = vrot.lane.b32.xlu0 %v923, 126
      %v1971 = vpop.permute.xlu0 %1970
      %v1972 = vsel %vm925, %v1957, 0
      %v1974 = vsel %vm925, %v1959, 0
      %v1976 = vsel %vm925, %v1961, 0
      %v1978 = vsel %vm925, %v1963, 0
      %v1980 = vsel %vm925, %v1965, 0
      %v1982 = vsel %vm925, %v1967, 0
      %v1984 = vsel %vm925, %v1969, 0
      %v1986 = vsel %vm925, %v1971, 0
      %1988 = vmatprep.subr.mxu0 0.0
      %1989 = vmatpush1.msra.mxu0 0.0
      %1990 = vmatprep.subr.mxu0 0.0
      %1991 = vmatpush1.msra.mxu0 0.0
      %1992 = vmatprep.subr.mxu0 0.0
      %1993 = vmatpush1.msra.mxu0 0.0
      %1994 = vmatprep.subr.mxu0 0.0
      %1995 = vmatpush1.msra.mxu0 0.0
      %1996 = vmatprep.subr.mxu0 0.0
      %1997 = vmatpush1.msra.mxu0 0.0
      %1998 = vmatprep.subr.mxu0 0.0
      %1999 = vmatpush1.msra.mxu0 0.0
      %2000 = vmatprep.subr.mxu0 0.0
      %2001 = vmatpush1.msra.mxu0 0.0
      %2002 = vmatprep.subr.mxu0 0.0
      %2003 = vmatpush1.msra.mxu0 0.0
      %2004 = vmatprep.subr.mxu0 0.0
      %2005 = vmatpush1.msra.mxu0 0.0
      %2006 = vmatprep.subr.mxu0 0.0
      %2007 = vmatpush1.msra.mxu0 0.0
      %2008 = vmatprep.subr.mxu0 0.0
      %2009 = vmatpush1.msra.mxu0 0.0
      %2010 = vmatprep.subr.mxu0 0.0
      %2011 = vmatpush1.msra.mxu0 0.0
      %2012 = vmatprep.subr.mxu0 0.0
      %2013 = vmatpush1.msra.mxu0 0.0
      %2014 = vmatprep.subr.mxu0 0.0
      %2015 = vmatpush1.msra.mxu0 0.0
      %2016 = vmatprep.subr.mxu0 0.0
      %2017 = vmatpush1.msra.mxu0 0.0
      %2018 = vmatprep.subr.mxu0 0.0
      %2019 = vmatpush1.msra.mxu0 %v952
      %2020 = vmatprep.subr.mxu0 0.0
      %2021 = vmatpush2.msra.mxu0 0.0
      %2022 = vmatprep.subr.mxu0 0.0
      %2023 = vmatpush2.msra.mxu0 0.0
      %2024 = vmatprep.subr.mxu0 0.0
      %2025 = vmatpush2.msra.mxu0 0.0
      %2026 = vmatprep.subr.mxu0 0.0
      %2027 = vmatpush2.msra.mxu0 0.0
      %2028 = vmatprep.subr.mxu0 0.0
      %2029 = vmatpush2.msra.mxu0 0.0
      %2030 = vmatprep.subr.mxu0 0.0
      %2031 = vmatpush2.msra.mxu0 0.0
      %2032 = vmatprep.subr.mxu0 0.0
      %2033 = vmatpush2.msra.mxu0 0.0
      %2034 = vmatprep.subr.mxu0 0.0
      %2035 = vmatpush2.msra.mxu0 0.0
      %2036 = vmatprep.subr.mxu0 0.0
      %2037 = vmatpush2.msra.mxu0 0.0
      %2038 = vmatprep.subr.mxu0 0.0
      %2039 = vmatpush2.msra.mxu0 0.0
      %2040 = vmatprep.subr.mxu0 0.0
      %2041 = vmatpush2.msra.mxu0 0.0
      %2042 = vmatprep.subr.mxu0 0.0
      %2043 = vmatpush2.msra.mxu0 0.0
      %2044 = vmatprep.subr.mxu0 0.0
      %2045 = vmatpush2.msra.mxu0 0.0
      %2046 = vmatprep.subr.mxu0 0.0
      %2047 = vmatpush2.msra.mxu0 0.0
      %2048 = vmatprep.subr.mxu0 0.0
      %2049 = vmatpush2.msra.mxu0 0.0
      %2050 = vmatprep.subr.mxu0 0.0
      %2051 = vmatpush2.msra.mxu0 0.0
      %2052 = vmatprep.mubr.f32.mxu0 0.0
      %2053 = vmatmul.mubr.f32.gmra.mxu0 %v1972
      %v2054 = vpop.f32.mrf.mxu0
      %v2055 = vadd.f32 0.0, %v2054
      %v2056 = vpop.f32.mrf.mxu0
      %2057 = vmatprep.mubr.f32.mxu0 0.0
      %2058 = vmatmul.mubr.f32.gmra.mxu0 %v1974
      %v2059 = vpop.f32.mrf.mxu0
      %v2060 = vadd.f32 0.0, %v2059
      %v2061 = vpop.f32.mrf.mxu0
      %2062 = vmatprep.mubr.f32.mxu0 0.0
      %2063 = vmatmul.mubr.f32.gmra.mxu0 %v1976
      %v2064 = vpop.f32.mrf.mxu0
      %v2065 = vadd.f32 0.0, %v2064
      %v2066 = vpop.f32.mrf.mxu0
      %2067 = vmatprep.mubr.f32.mxu0 0.0
      %2068 = vmatmul.mubr.f32.gmra.mxu0 %v1978
      %v2069 = vpop.f32.mrf.mxu0
      %v2070 = vadd.f32 0.0, %v2069
      %v2071 = vpop.f32.mrf.mxu0
      %2072 = vmatprep.mubr.f32.mxu0 0.0
      %2073 = vmatmul.mubr.f32.gmra.mxu0 %v1980
      %v2074 = vpop.f32.mrf.mxu0
      %v2075 = vadd.f32 0.0, %v2074
      %v2076 = vpop.f32.mrf.mxu0
      %2077 = vmatprep.mubr.f32.mxu0 0.0
      %2078 = vmatmul.mubr.f32.gmra.mxu0 %v1982
      %v2079 = vpop.f32.mrf.mxu0
      %v2080 = vadd.f32 0.0, %v2079
      %v2081 = vpop.f32.mrf.mxu0
      %2082 = vmatprep.mubr.f32.mxu0 0.0
      %2083 = vmatmul.mubr.f32.gmra.mxu0 %v1984
      %v2084 = vpop.f32.mrf.mxu0
      %v2085 = vadd.f32 0.0, %v2084
      %v2086 = vpop.f32.mrf.mxu0
      %2087 = vmatprep.mubr.f32.mxu0 0.0
      %2088 = vmatmul.mubr.f32.gmra.mxu0 %v1986
      %v2089 = vpop.f32.mrf.mxu0
      %v2090 = vadd.f32 0.0, %v2089
      %v2091 = vpop.f32.mrf.mxu0
      %2092 = vdwg.mxu0
      %v2093 = vmul.f32 %v1948, %v2055
      %v2094 = vmul.f32 %v1949, %v2060
      %v2095 = vmul.f32 %v1950, %v2065
      %v2096 = vmul.f32 %v1951, %v2070
      %v2097 = vmul.f32 %v1952, %v2075
      %v2098 = vmul.f32 %v1953, %v2080
      %v2099 = vmul.f32 %v1954, %v2085
      %v2100 = vmul.f32 %v1955, %v2090
      %v2101 = vadd.f32 %v1498, %v2093
      %v2102 = vadd.f32 %v1499, %v2094
      %v2103 = vadd.f32 %v1500, %v2095
      %v2104 = vadd.f32 %v1501, %v2096
      %v2105 = vadd.f32 %v1502, %v2097
      %v2106 = vadd.f32 %v1503, %v2098
      %v2107 = vadd.f32 %v1504, %v2099
      %v2108 = vadd.f32 %v1505, %v2100
      %v2109 = vld [vmem:[%s6] sm:$0xff]
      %v2111 = vsel %vm288, %v2101, 0
      %v2114 = vsel %vm288, %v2102, 0
      %v2117 = vsel %vm288, %v2103, 0
      %v2120 = vsel %vm288, %v2104, 0
      %v2123 = vsel %vm288, %v2105, 0
      %v2126 = vsel %vm288, %v2106, 0
      %v2129 = vsel %vm288, %v2107, 0
      %v2132 = vsel %vm288, %v2108, 0
      %2134 = vmatprep.subr.mxu0 0.0
      %2135 = vmatpush1.msra.mxu0 0.0
      %2136 = vmatprep.subr.mxu0 0.0
      %2137 = vmatpush1.msra.mxu0 0.0
      %2138 = vmatprep.subr.mxu0 0.0
      %2139 = vmatpush1.msra.mxu0 0.0
      %2140 = vmatprep.subr.mxu0 0.0
      %2141 = vmatpush1.msra.mxu0 0.0
      %2142 = vmatprep.subr.mxu0 0.0
      %2143 = vmatpush1.msra.mxu0 0.0
      %2144 = vmatprep.subr.mxu0 0.0
      %2145 = vmatpush1.msra.mxu0 0.0
      %2146 = vmatprep.subr.mxu0 0.0
      %2147 = vmatpush1.msra.mxu0 0.0
      %2148 = vmatprep.subr.mxu0 0.0
      %2149 = vmatpush1.msra.mxu0 0.0
      %2150 = vmatprep.subr.mxu0 0.0
      %2151 = vmatpush1.msra.mxu0 0.0
      %2152 = vmatprep.subr.mxu0 0.0
      %2153 = vmatpush1.msra.mxu0 0.0
      %2154 = vmatprep.subr.mxu0 0.0
      %2155 = vmatpush1.msra.mxu0 0.0
      %2156 = vmatprep.subr.mxu0 0.0
      %2157 = vmatpush1.msra.mxu0 0.0
      %2158 = vmatprep.subr.mxu0 0.0
      %2159 = vmatpush1.msra.mxu0 0.0
      %2160 = vmatprep.subr.mxu0 0.0
      %2161 = vmatpush1.msra.mxu0 0.0
      %2162 = vmatprep.subr.mxu0 0.0
      %2163 = vmatpush1.msra.mxu0 0.0
      %2164 = vmatprep.subr.mxu0 0.0
      %2165 = vmatpush1.msra.mxu0 %v2109
      %2166 = vmatprep.subr.mxu0 0.0
      %2167 = vmatpush2.msra.mxu0 0.0
      %2168 = vmatprep.subr.mxu0 0.0
      %2169 = vmatpush2.msra.mxu0 0.0
      %2170 = vmatprep.subr.mxu0 0.0
      %2171 = vmatpush2.msra.mxu0 0.0
      %2172 = vmatprep.subr.mxu0 0.0
      %2173 = vmatpush2.msra.mxu0 0.0
      %2174 = vmatprep.subr.mxu0 0.0
      %2175 = vmatpush2.msra.mxu0 0.0
      %2176 = vmatprep.subr.mxu0 0.0
      %2177 = vmatpush2.msra.mxu0 0.0
      %2178 = vmatprep.subr.mxu0 0.0
      %2179 = vmatpush2.msra.mxu0 0.0
      %2180 = vmatprep.subr.mxu0 0.0
      %2181 = vmatpush2.msra.mxu0 0.0
      %2182 = vmatprep.subr.mxu0 0.0
      %2183 = vmatpush2.msra.mxu0 0.0
      %2184 = vmatprep.subr.mxu0 0.0
      %2185 = vmatpush2.msra.mxu0 0.0
      %2186 = vmatprep.subr.mxu0 0.0
      %2187 = vmatpush2.msra.mxu0 0.0
      %2188 = vmatprep.subr.mxu0 0.0
      %2189 = vmatpush2.msra.mxu0 0.0
      %2190 = vmatprep.subr.mxu0 0.0
      %2191 = vmatpush2.msra.mxu0 0.0
      %2192 = vmatprep.subr.mxu0 0.0
      %2193 = vmatpush2.msra.mxu0 0.0
      %2194 = vmatprep.subr.mxu0 0.0
      %2195 = vmatpush2.msra.mxu0 0.0
      %2196 = vmatprep.subr.mxu0 0.0
      %2197 = vmatpush2.msra.mxu0 0.0
      %2198 = vmatprep.mubr.f32.mxu0 0.0
      %2199 = vmatmul.mubr.f32.gmra.mxu0 %v2111
      %v2200 = vpop.f32.mrf.mxu0
      %v2201 = vadd.f32 0.0, %v2200
      %v2202 = vpop.f32.mrf.mxu0
      %2203 = vmatprep.mubr.f32.mxu0 0.0
      %2204 = vmatmul.mubr.f32.gmra.mxu0 %v2114
      %v2205 = vpop.f32.mrf.mxu0
      %v2206 = vadd.f32 0.0, %v2205
      %v2207 = vpop.f32.mrf.mxu0
      %2208 = vmatprep.mubr.f32.mxu0 0.0
      %2209 = vmatmul.mubr.f32.gmra.mxu0 %v2117
      %v2210 = vpop.f32.mrf.mxu0
      %v2211 = vadd.f32 0.0, %v2210
      %v2212 = vpop.f32.mrf.mxu0
      %2213 = vmatprep.mubr.f32.mxu0 0.0
      %2214 = vmatmul.mubr.f32.gmra.mxu0 %v2120
      %v2215 = vpop.f32.mrf.mxu0
      %v2216 = vadd.f32 0.0, %v2215
      %v2217 = vpop.f32.mrf.mxu0
      %2218 = vmatprep.mubr.f32.mxu0 0.0
      %2219 = vmatmul.mubr.f32.gmra.mxu0 %v2123
      %v2220 = vpop.f32.mrf.mxu0
      %v2221 = vadd.f32 0.0, %v2220
      %v2222 = vpop.f32.mrf.mxu0
      %2223 = vmatprep.mubr.f32.mxu0 0.0
      %2224 = vmatmul.mubr.f32.gmra.mxu0 %v2126
      %v2225 = vpop.f32.mrf.mxu0
      %v2226 = vadd.f32 0.0, %v2225
      %v2227 = vpop.f32.mrf.mxu0
      %2228 = vmatprep.mubr.f32.mxu0 0.0
      %2229 = vmatmul.mubr.f32.gmra.mxu0 %v2129
      %v2230 = vpop.f32.mrf.mxu0
      %v2231 = vadd.f32 0.0, %v2230
      %v2232 = vpop.f32.mrf.mxu0
      %2233 = vmatprep.mubr.f32.mxu0 0.0
      %2234 = vmatmul.mubr.f32.gmra.mxu0 %v2132
      %v2235 = vpop.f32.mrf.mxu0
      %v2236 = vadd.f32 0.0, %v2235
      %v2237 = vpop.f32.mrf.mxu0
      %2238 = vdwg.mxu0
      %2239 = vst.msk [vmem:[%s278] sm:$0xff] %vm288, %v2201
      %2240 = vst.msk [vmem:[%s278 + $0x8] sm:$0xff] %vm288, %v2206
      %2241 = vst.msk [vmem:[%s278 + $0x10] sm:$0xff] %vm288, %v2211
      %2242 = vst.msk [vmem:[%s278 + $0x18] sm:$0xff] %vm288, %v2216
      %2243 = vst.msk [vmem:[%s278 + $0x20] sm:$0xff] %vm288, %v2221
      %2244 = vst.msk [vmem:[%s278 + $0x28] sm:$0xff] %vm288, %v2226
      %2245 = vst.msk [vmem:[%s278 + $0x30] sm:$0xff] %vm288, %v2231
      %2246 = vst.msk [vmem:[%s278 + $0x38] sm:$0xff] %vm288, %v2236
      %p2247 = scmp.lt.s32.totalorder %s18, 1
      %s2248 = scalar_select %p2247, %s18, 1
      %s2249 = smul.addr %s2248, 8
      %s2250 = smul.addr %s2249, 8
      %s2251 = scalar_lea.vmem %s7, %s2250
      // Predicated region
      $region49: #{tpu_custom_call.1} parent=47 // pred_check
        %p2252 = pneg %p188
      $region50: #{tpu_custom_call.1} parent=47 // pred_check_branch
        %2254 = sbr.rel (%p2252) target = $region52
      $region51: #{tpu_custom_call.1} parent=47 // pred_region
        _
      $region52: #{tpu_custom_call.1} parent=47 // pred_fallthru
        _
    $region48: #{tpu_custom_call.1} parent=5 // pred_fallthru
      _
    %p2255 = scmp.le.s32.totalorder 2, %s13
    // Predicated region
    $region53: #{tpu_custom_call.1} parent=5 // pred_check
      %p2256 = pneg %p2255
    $region54: #{tpu_custom_call.1} parent=5 // pred_check_branch
      %2258 = sbr.rel (%p2256) target = $region56
    $region55: #{tpu_custom_call.1} parent=5 // pred_region
      %s2259 = ssub.s32 %s13, 2
      // Predicated region
      $region57: #{tpu_custom_call.1} parent=55 // pred_check
        %p2260 = pneg %p194
      $region58: #{tpu_custom_call.1} parent=55 // pred_check_branch
        %2262 = sbr.rel (%p2260) target = $region60
      $region59: #{tpu_custom_call.1} parent=55 // pred_region
        %p2263 = scmp.lt.s32.totalorder %s19, 1
        %s2264 = scalar_select %p2263, %s19, 1
        %s2265 = smul.addr %s2264, 8
        %s2266 = smul.addr %s2265, 8
        %s2267 = scalar_lea.vmem %s7, %s2266
      $region60: #{tpu_custom_call.1} parent=55 // pred_fallthru
        _
    $region56: #{tpu_custom_call.1} parent=5 // pred_fallthru
      _
  $region6: #{tpu_custom_call.1} parent=0 // loop_footer
    %s17 = sadd.s32 1, %s13
  $region7: #{tpu_custom_call.1} parent=0 // loop_footer_branch
    %12 = sbr.rel target = $region3
  $region8: #{tpu_custom_call.1} parent=0 // loop_exit
    _

</llo_original>
